<compile_context>
chip_gen: v6e
topology: v6e:2x2x1
jax: 0.10.0
libtpu: 0.0.40
codegen_flags: <defaults>
</compile_context>

<pallas_src>
import functools

import jax
import jax.numpy as jnp
from jax import lax
from jax.experimental import pallas as pl
from jax.experimental.pallas import tpu as pltpu


def _leaky_relu(x, slope):
    return jnp.where(x > 0, x, slope * x)


def sthan_fused_kernel(x_ref, ht_ref, eattr_ref,
                       w1_ref, wax1_ref, wae1_ref, b1_ref,
                       w2_ref, wax2_ref, wae2_ref, b2_ref,
                       out_ref, *, heads1, heads2, out_dim, negative_slope):
    Ht = ht_ref[...]                                   # (M, N) dense 0/1 incidence
    mask = Ht > 0.0

    # Degree normalizations (hyperedge_weight == 1); shared by both layers.
    deg_e = jnp.sum(Ht, axis=1, keepdims=True)         # (M, 1)  lane reduce
    b_norm = jnp.where(deg_e > 0, 1.0 / deg_e, 0.0)    # B^-1
    ones_m = jnp.ones((Ht.shape[0], 1), jnp.float32)
    deg_n = lax.dot_general(Ht, ones_m, (((0,), (0,)), ((), ())),
                            preferred_element_type=jnp.float32)   # (N, 1)
    d_norm = jnp.where(deg_n > 0, 1.0 / deg_n, 0.0)    # D^-1

    eattr_bf = eattr_ref[...].astype(jnp.bfloat16)     # (M, D_in)

    def conv(x, w_ref, wax_ref, wae_ref, bias_ref, heads):
        x_bf = x.astype(jnp.bfloat16)
        w_bf = w_ref[...].astype(jnp.bfloat16)
        # fused-head node transform: (N, heads*F) — one MXU-tile wide for layer 1
        xh_all = jnp.dot(x_bf, w_bf, preferred_element_type=jnp.float32)

        # attention logits via folded projections (att pre-multiplied into W)
        a_x_t = lax.dot_general(wax_ref[...].astype(jnp.bfloat16), x_bf,
                                (((0,), (1,)), ((), ())),
                                preferred_element_type=jnp.float32)   # (heads, N)
        a_e = jnp.dot(eattr_bf, wae_ref[...].astype(jnp.bfloat16),
                      preferred_element_type=jnp.float32)             # (M, heads)

        acc = jnp.zeros((x.shape[0], out_dim), jnp.float32)
        for h in range(heads):                          # static unroll over heads
            xh_bf = xh_all[:, h * out_dim:(h + 1) * out_dim].astype(jnp.bfloat16)

            # (M, N) attention tile: softmax over nodes = lane-axis reduction
            logits = a_e[:, h:h + 1] + a_x_t[h:h + 1, :]              # (M, N)
            alpha = _leaky_relu(logits, negative_slope)
            alpha_m = jnp.where(mask, alpha, -1e30)
            amax = jnp.max(alpha_m, axis=1, keepdims=True)            # (M, 1)
            ex = jnp.exp(alpha_m - amax)                 # masked entries -> exp(-huge)=0
            denom = jnp.sum(ex, axis=1, keepdims=True)                # (M, 1)
            # fold B^-1 into the softmax normalization (empty edges -> b_norm=0 -> 0)
            scale = b_norm * pl.reciprocal(denom + 1e-16, approx=True)
            attn = (ex * scale).astype(jnp.bfloat16)                  # (M, N)

            # node -> hyperedge, then hyperedge -> node (contract M, no transpose)
            he = jnp.dot(attn, xh_bf, preferred_element_type=jnp.float32)     # (M, F)
            out_h = lax.dot_general(attn, he.astype(jnp.bfloat16),
                                    (((0,), (0,)), ((), ())),
                                    preferred_element_type=jnp.float32)       # (N, F)
            acc = acc + out_h

        # D^-1 and the 1/heads mean folded into one epilogue scale, + bias
        out = acc * (d_norm * (1.0 / heads)) + bias_ref[...]
        return _leaky_relu(out, negative_slope)          # STHAN-level leaky_relu

    h1 = conv(x_ref[...], w1_ref, wax1_ref, wae1_ref, b1_ref, heads1)
    out_ref[...] = conv(h1, w2_ref, wax2_ref, wae2_ref, b2_ref, heads2)
    # TODO(synk): for production N / batched graphs, add a leading "parallel"
    # grid axis (v7x dual-TC) and make the output slab a multiple of 128 lanes.


def _fold_att(W, att, heads, out_dim):
    # w_att[d, h] = sum_f W[d, h*F + f] * att[h, f]
    return jnp.einsum("dhf,hf->dh", W.reshape(W.shape[0], heads, out_dim), att)


def sthan_forward(x, H, eattr, params):
    n, _ = x.shape
    out_dim = params["b1"].shape[1]
    heads1 = params["att1_x"].shape[0]
    heads2 = params["att2_x"].shape[0]

    Ht = jnp.transpose(H)                               # (M, N) once, outside kernel
    wax1 = _fold_att(params["w1"], params["att1_x"], heads1, out_dim)
    wae1 = _fold_att(params["w1"], params["att1_e"], heads1, out_dim)
    wax2 = _fold_att(params["w2"], params["att2_x"], heads2, out_dim)
    wae2 = _fold_att(params["w2"], params["att2_e"], heads2, out_dim)

    kernel = functools.partial(sthan_fused_kernel, heads1=heads1, heads2=heads2,
                               out_dim=out_dim, negative_slope=0.2)
    args = (x, Ht, eattr,
            params["w1"], wax1, wae1, params["b1"],
            params["w2"], wax2, wae2, params["b2"])

    return pl.pallas_call(
        kernel,
        in_specs=[pl.BlockSpec(memory_space=pltpu.MemorySpace.VMEM)
                  for _ in args],
        out_specs=pl.BlockSpec(memory_space=pltpu.MemorySpace.VMEM),
        out_shape=jax.ShapeDtypeStruct((n, out_dim), jnp.float32),
    )(*args)


if __name__ == "__main__":
    # TODO(synk): dropout(p=0.5) inside HypergraphConv is training-only; this is
    # the eval-mode forward. Incidence-matrix construction from the DGLGraph is
    # host-side glue; a dense (N, M) incidence is passed in. self.linear is
    # unused by the reference forward.
    node_emb_dim = 32     # D
    num_nodes = 32        # N
    num_edge_types = 8    # M (hyperedges)
    heads1 = 4

    key = jax.random.PRNGKey(0)
    k = jax.random.split(key, 8)

    x = jax.random.normal(k[0], (num_nodes, node_emb_dim), jnp.float32)
    eattr = jax.random.normal(k[1], (num_edge_types, node_emb_dim), jnp.float32)

    # deterministic synthetic incidence matrix: each node joins 1-2 hyperedges
    rows = jnp.arange(num_nodes)
    H = jnp.zeros((num_nodes, num_edge_types), jnp.float32)
    H = H.at[rows, rows % num_edge_types].set(1.0)
    H = H.at[rows, (rows // num_edge_types) % num_edge_types].set(1.0)

    params = {
        "w1": 0.1 * jax.random.normal(k[2], (node_emb_dim, heads1 * node_emb_dim),
                                      jnp.float32),
        "att1_x": 0.1 * jax.random.normal(k[3], (heads1, node_emb_dim), jnp.float32),
        "att1_e": 0.1 * jax.random.normal(k[4], (heads1, node_emb_dim), jnp.float32),
        "b1": jnp.zeros((1, node_emb_dim), jnp.float32),
        "w2": 0.1 * jax.random.normal(k[5], (node_emb_dim, node_emb_dim), jnp.float32),
        "att2_x": 0.1 * jax.random.normal(k[6], (1, node_emb_dim), jnp.float32),
        "att2_e": 0.1 * jax.random.normal(k[7], (1, node_emb_dim), jnp.float32),
        "b2": jnp.zeros((1, node_emb_dim), jnp.float32),
    }

    out = jax.jit(sthan_forward)(x, H, eattr, params)
    out = jax.block_until_ready(out)

    assert out.shape == (num_nodes, node_emb_dim)
    assert bool(jnp.all(jnp.isfinite(out)))
    print("KERNEL_OK")
</pallas_src>

<mosaic_0001>
module attributes {stable_mosaic.version = 11 : i64} {
  func.func @sthan_fused_kernel(%arg0: memref<32x32xf32, #tpu.memory_space<vmem>>, %arg1: memref<8x32xf32, #tpu.memory_space<vmem>>, %arg2: memref<8x32xf32, #tpu.memory_space<vmem>>, %arg3: memref<32x128xf32, #tpu.memory_space<vmem>>, %arg4: memref<32x4xf32, #tpu.memory_space<vmem>>, %arg5: memref<32x4xf32, #tpu.memory_space<vmem>>, %arg6: memref<1x32xf32, #tpu.memory_space<vmem>>, %arg7: memref<32x32xf32, #tpu.memory_space<vmem>>, %arg8: memref<32x1xf32, #tpu.memory_space<vmem>>, %arg9: memref<32x1xf32, #tpu.memory_space<vmem>>, %arg10: memref<1x32xf32, #tpu.memory_space<vmem>>, %arg11: memref<32x32xf32, #tpu.memory_space<vmem>>) attributes {dimension_semantics = [], scalar_prefetch = 0 : i64, scratch_operands = 0 : i64, tpu.core_type = #tpu.core_type<tc>} {
    %c0 = arith.constant 0 : index
    %c0_0 = arith.constant 0 : index
    %0 = vector.load %arg1[%c0, %c0_0] : memref<8x32xf32, #tpu.memory_space<vmem>>, vector<8x32xf32>
    %cst = arith.constant 0.000000e+00 : f32
    %1 = vector.broadcast %cst : f32 to vector<8x32xf32>
    %2 = arith.cmpf ogt, %0, %1 : vector<8x32xf32>
    %cst_1 = arith.constant dense<0.000000e+00> : vector<8xf32>
    %3 = vector.multi_reduction <add>, %0, %cst_1 [1] : vector<8x32xf32> to vector<8xf32>
    %4 = vector.shape_cast %3 : vector<8xf32> to vector<8x1xf32>
    %cst_2 = arith.constant 0.000000e+00 : f32
    %5 = vector.broadcast %cst_2 : f32 to vector<8x1xf32>
    %6 = arith.cmpf ogt, %4, %5 : vector<8x1xf32>
    %cst_3 = arith.constant 1.000000e+00 : f32
    %7 = vector.broadcast %cst_3 : f32 to vector<8x1xf32>
    %8 = arith.divf %7, %4 : vector<8x1xf32>
    %cst_4 = arith.constant 0.000000e+00 : f32
    %9 = vector.broadcast %cst_4 : f32 to vector<8x1xf32>
    %10 = arith.select %6, %8, %9 : vector<8x1xi1>, vector<8x1xf32>
    %cst_5 = arith.constant 1.000000e+00 : f32
    %11 = vector.broadcast %cst_5 : f32 to vector<8x1xf32>
    %cst_6 = arith.constant dense<0.000000e+00> : vector<32x1xf32>
    %12 = tpu.matmul %0, %11, %cst_6 {dimension_numbers = #tpu.dot_dimension_numbers<[0], [0], [1], [1], [0, 1, 1, 1], [], []>} : vector<8x32xf32>, vector<8x1xf32>, vector<32x1xf32> -> vector<32x1xf32>
    %cst_7 = arith.constant 0.000000e+00 : f32
    %13 = vector.broadcast %cst_7 : f32 to vector<32x1xf32>
    %14 = arith.cmpf ogt, %12, %13 : vector<32x1xf32>
    %cst_8 = arith.constant 1.000000e+00 : f32
    %15 = vector.broadcast %cst_8 : f32 to vector<32x1xf32>
    %16 = arith.divf %15, %12 : vector<32x1xf32>
    %cst_9 = arith.constant 0.000000e+00 : f32
    %17 = vector.broadcast %cst_9 : f32 to vector<32x1xf32>
    %18 = arith.select %14, %16, %17 : vector<32x1xi1>, vector<32x1xf32>
    %c0_10 = arith.constant 0 : index
    %c0_11 = arith.constant 0 : index
    %19 = vector.load %arg2[%c0_10, %c0_11] : memref<8x32xf32, #tpu.memory_space<vmem>>, vector<8x32xf32>
    %20 = arith.truncf %19 : vector<8x32xf32> to vector<8x32xbf16>
    %c0_12 = arith.constant 0 : index
    %c0_13 = arith.constant 0 : index
    %21 = vector.load %arg0[%c0_12, %c0_13] : memref<32x32xf32, #tpu.memory_space<vmem>>, vector<32x32xf32>
    %22 = arith.truncf %21 : vector<32x32xf32> to vector<32x32xbf16>
    %c0_14 = arith.constant 0 : index
    %c0_15 = arith.constant 0 : index
    %23 = vector.load %arg3[%c0_14, %c0_15] : memref<32x128xf32, #tpu.memory_space<vmem>>, vector<32x128xf32>
    %24 = arith.truncf %23 : vector<32x128xf32> to vector<32x128xbf16>
    %cst_16 = arith.constant dense<0.000000e+00> : vector<32x128xf32>
    %25 = tpu.matmul %22, %24, %cst_16 {dimension_numbers = #tpu.dot_dimension_numbers<[1], [0], [0], [1], [0, 0, 1, 1], [], []>} : vector<32x32xbf16>, vector<32x128xbf16>, vector<32x128xf32> -> vector<32x128xf32>
    %c0_17 = arith.constant 0 : index
    %c0_18 = arith.constant 0 : index
    %26 = vector.load %arg4[%c0_17, %c0_18] : memref<32x4xf32, #tpu.memory_space<vmem>>, vector<32x4xf32>
    %27 = arith.truncf %26 : vector<32x4xf32> to vector<32x4xbf16>
    %cst_19 = arith.constant dense<0.000000e+00> : vector<4x32xf32>
    %28 = tpu.matmul %27, %22, %cst_19 {dimension_numbers = #tpu.dot_dimension_numbers<[0], [1], [1], [0], [0, 1, 1, 0], [], []>} : vector<32x4xbf16>, vector<32x32xbf16>, vector<4x32xf32> -> vector<4x32xf32>
    %c0_20 = arith.constant 0 : index
    %c0_21 = arith.constant 0 : index
    %29 = vector.load %arg5[%c0_20, %c0_21] : memref<32x4xf32, #tpu.memory_space<vmem>>, vector<32x4xf32>
    %30 = arith.truncf %29 : vector<32x4xf32> to vector<32x4xbf16>
    %cst_22 = arith.constant dense<0.000000e+00> : vector<8x4xf32>
    %31 = tpu.matmul %20, %30, %cst_22 {dimension_numbers = #tpu.dot_dimension_numbers<[1], [0], [0], [1], [0, 0, 1, 1], [], []>} : vector<8x32xbf16>, vector<32x4xbf16>, vector<8x4xf32> -> vector<8x4xf32>
    %cst_23 = arith.constant 0.000000e+00 : f32
    %32 = vector.broadcast %cst_23 : f32 to vector<32x32xf32>
    %33 = vector.extract_strided_slice %25 {offsets = [0, 0], sizes = [32, 32], strides = [1, 1]} : vector<32x128xf32> to vector<32x32xf32>
    %34 = arith.truncf %33 : vector<32x32xf32> to vector<32x32xbf16>
    %35 = vector.extract_strided_slice %31 {offsets = [0, 0], sizes = [8, 1], strides = [1, 1]} : vector<8x4xf32> to vector<8x1xf32>
    %36 = vector.extract_strided_slice %28 {offsets = [0, 0], sizes = [1, 32], strides = [1, 1]} : vector<4x32xf32> to vector<1x32xf32>
    %37 = vector.broadcast %35 : vector<8x1xf32> to vector<8x32xf32>
    %38 = vector.broadcast %36 : vector<1x32xf32> to vector<8x32xf32>
    %39 = arith.addf %37, %38 : vector<8x32xf32>
    %cst_24 = arith.constant 0.000000e+00 : f32
    %40 = vector.broadcast %cst_24 : f32 to vector<8x32xf32>
    %41 = arith.cmpf ogt, %39, %40 : vector<8x32xf32>
    %cst_25 = arith.constant 2.000000e-01 : f32
    %42 = vector.broadcast %cst_25 : f32 to vector<8x32xf32>
    %43 = arith.mulf %42, %39 : vector<8x32xf32>
    %44 = arith.select %41, %39, %43 : vector<8x32xi1>, vector<8x32xf32>
    %cst_26 = arith.constant -1.000000e+30 : f32
    %45 = vector.broadcast %cst_26 : f32 to vector<8x32xf32>
    %46 = arith.select %2, %44, %45 : vector<8x32xi1>, vector<8x32xf32>
    %cst_27 = arith.constant dense<0xFF800000> : vector<8xf32>
    %47 = vector.multi_reduction <maximumf>, %46, %cst_27 [1] : vector<8x32xf32> to vector<8xf32>
    %48 = vector.shape_cast %47 : vector<8xf32> to vector<8x1xf32>
    %49 = vector.broadcast %48 : vector<8x1xf32> to vector<8x32xf32>
    %50 = arith.subf %46, %49 : vector<8x32xf32>
    %51 = math.exp %50 : vector<8x32xf32>
    %cst_28 = arith.constant dense<0.000000e+00> : vector<8xf32>
    %52 = vector.multi_reduction <add>, %51, %cst_28 [1] : vector<8x32xf32> to vector<8xf32>
    %53 = vector.shape_cast %52 : vector<8xf32> to vector<8x1xf32>
    %cst_29 = arith.constant 1.000000e-16 : f32
    %54 = vector.broadcast %cst_29 : f32 to vector<8x1xf32>
    %55 = arith.addf %53, %54 : vector<8x1xf32>
    %56 = tpu.reciprocal %55 {approx = true} : vector<8x1xf32> -> vector<8x1xf32>
    %57 = arith.mulf %10, %56 : vector<8x1xf32>
    %58 = vector.broadcast %57 : vector<8x1xf32> to vector<8x32xf32>
    %59 = arith.mulf %51, %58 : vector<8x32xf32>
    %60 = arith.truncf %59 : vector<8x32xf32> to vector<8x32xbf16>
    %cst_30 = arith.constant dense<0.000000e+00> : vector<8x32xf32>
    %61 = tpu.matmul %60, %34, %cst_30 {dimension_numbers = #tpu.dot_dimension_numbers<[1], [0], [0], [1], [0, 0, 1, 1], [], []>} : vector<8x32xbf16>, vector<32x32xbf16>, vector<8x32xf32> -> vector<8x32xf32>
    %62 = arith.truncf %61 : vector<8x32xf32> to vector<8x32xbf16>
    %cst_31 = arith.constant dense<0.000000e+00> : vector<32x32xf32>
    %63 = tpu.matmul %60, %62, %cst_31 {dimension_numbers = #tpu.dot_dimension_numbers<[0], [0], [1], [1], [0, 1, 1, 1], [], []>} : vector<8x32xbf16>, vector<8x32xbf16>, vector<32x32xf32> -> vector<32x32xf32>
    %64 = arith.addf %32, %63 : vector<32x32xf32>
    %65 = vector.extract_strided_slice %25 {offsets = [0, 32], sizes = [32, 32], strides = [1, 1]} : vector<32x128xf32> to vector<32x32xf32>
    %66 = arith.truncf %65 : vector<32x32xf32> to vector<32x32xbf16>
    %67 = vector.extract_strided_slice %31 {offsets = [0, 1], sizes = [8, 1], strides = [1, 1]} : vector<8x4xf32> to vector<8x1xf32>
    %68 = vector.extract_strided_slice %28 {offsets = [1, 0], sizes = [1, 32], strides = [1, 1]} : vector<4x32xf32> to vector<1x32xf32>
    %69 = vector.broadcast %67 : vector<8x1xf32> to vector<8x32xf32>
    %70 = vector.broadcast %68 : vector<1x32xf32> to vector<8x32xf32>
    %71 = arith.addf %69, %70 : vector<8x32xf32>
    %cst_32 = arith.constant 0.000000e+00 : f32
    %72 = vector.broadcast %cst_32 : f32 to vector<8x32xf32>
    %73 = arith.cmpf ogt, %71, %72 : vector<8x32xf32>
    %cst_33 = arith.constant 2.000000e-01 : f32
    %74 = vector.broadcast %cst_33 : f32 to vector<8x32xf32>
    %75 = arith.mulf %74, %71 : vector<8x32xf32>
    %76 = arith.select %73, %71, %75 : vector<8x32xi1>, vector<8x32xf32>
    %cst_34 = arith.constant -1.000000e+30 : f32
    %77 = vector.broadcast %cst_34 : f32 to vector<8x32xf32>
    %78 = arith.select %2, %76, %77 : vector<8x32xi1>, vector<8x32xf32>
    %cst_35 = arith.constant dense<0xFF800000> : vector<8xf32>
    %79 = vector.multi_reduction <maximumf>, %78, %cst_35 [1] : vector<8x32xf32> to vector<8xf32>
    %80 = vector.shape_cast %79 : vector<8xf32> to vector<8x1xf32>
    %81 = vector.broadcast %80 : vector<8x1xf32> to vector<8x32xf32>
    %82 = arith.subf %78, %81 : vector<8x32xf32>
    %83 = math.exp %82 : vector<8x32xf32>
    %cst_36 = arith.constant dense<0.000000e+00> : vector<8xf32>
    %84 = vector.multi_reduction <add>, %83, %cst_36 [1] : vector<8x32xf32> to vector<8xf32>
    %85 = vector.shape_cast %84 : vector<8xf32> to vector<8x1xf32>
    %cst_37 = arith.constant 1.000000e-16 : f32
    %86 = vector.broadcast %cst_37 : f32 to vector<8x1xf32>
    %87 = arith.addf %85, %86 : vector<8x1xf32>
    %88 = tpu.reciprocal %87 {approx = true} : vector<8x1xf32> -> vector<8x1xf32>
    %89 = arith.mulf %10, %88 : vector<8x1xf32>
    %90 = vector.broadcast %89 : vector<8x1xf32> to vector<8x32xf32>
    %91 = arith.mulf %83, %90 : vector<8x32xf32>
    %92 = arith.truncf %91 : vector<8x32xf32> to vector<8x32xbf16>
    %cst_38 = arith.constant dense<0.000000e+00> : vector<8x32xf32>
    %93 = tpu.matmul %92, %66, %cst_38 {dimension_numbers = #tpu.dot_dimension_numbers<[1], [0], [0], [1], [0, 0, 1, 1], [], []>} : vector<8x32xbf16>, vector<32x32xbf16>, vector<8x32xf32> -> vector<8x32xf32>
    %94 = arith.truncf %93 : vector<8x32xf32> to vector<8x32xbf16>
    %cst_39 = arith.constant dense<0.000000e+00> : vector<32x32xf32>
    %95 = tpu.matmul %92, %94, %cst_39 {dimension_numbers = #tpu.dot_dimension_numbers<[0], [0], [1], [1], [0, 1, 1, 1], [], []>} : vector<8x32xbf16>, vector<8x32xbf16>, vector<32x32xf32> -> vector<32x32xf32>
    %96 = arith.addf %64, %95 : vector<32x32xf32>
    %97 = vector.extract_strided_slice %25 {offsets = [0, 64], sizes = [32, 32], strides = [1, 1]} : vector<32x128xf32> to vector<32x32xf32>
    %98 = arith.truncf %97 : vector<32x32xf32> to vector<32x32xbf16>
    %99 = vector.extract_strided_slice %31 {offsets = [0, 2], sizes = [8, 1], strides = [1, 1]} : vector<8x4xf32> to vector<8x1xf32>
    %100 = vector.extract_strided_slice %28 {offsets = [2, 0], sizes = [1, 32], strides = [1, 1]} : vector<4x32xf32> to vector<1x32xf32>
    %101 = vector.broadcast %99 : vector<8x1xf32> to vector<8x32xf32>
    %102 = vector.broadcast %100 : vector<1x32xf32> to vector<8x32xf32>
    %103 = arith.addf %101, %102 : vector<8x32xf32>
    %cst_40 = arith.constant 0.000000e+00 : f32
    %104 = vector.broadcast %cst_40 : f32 to vector<8x32xf32>
    %105 = arith.cmpf ogt, %103, %104 : vector<8x32xf32>
    %cst_41 = arith.constant 2.000000e-01 : f32
    %106 = vector.broadcast %cst_41 : f32 to vector<8x32xf32>
    %107 = arith.mulf %106, %103 : vector<8x32xf32>
    %108 = arith.select %105, %103, %107 : vector<8x32xi1>, vector<8x32xf32>
    %cst_42 = arith.constant -1.000000e+30 : f32
    %109 = vector.broadcast %cst_42 : f32 to vector<8x32xf32>
    %110 = arith.select %2, %108, %109 : vector<8x32xi1>, vector<8x32xf32>
    %cst_43 = arith.constant dense<0xFF800000> : vector<8xf32>
    %111 = vector.multi_reduction <maximumf>, %110, %cst_43 [1] : vector<8x32xf32> to vector<8xf32>
    %112 = vector.shape_cast %111 : vector<8xf32> to vector<8x1xf32>
    %113 = vector.broadcast %112 : vector<8x1xf32> to vector<8x32xf32>
    %114 = arith.subf %110, %113 : vector<8x32xf32>
    %115 = math.exp %114 : vector<8x32xf32>
    %cst_44 = arith.constant dense<0.000000e+00> : vector<8xf32>
    %116 = vector.multi_reduction <add>, %115, %cst_44 [1] : vector<8x32xf32> to vector<8xf32>
    %117 = vector.shape_cast %116 : vector<8xf32> to vector<8x1xf32>
    %cst_45 = arith.constant 1.000000e-16 : f32
    %118 = vector.broadcast %cst_45 : f32 to vector<8x1xf32>
    %119 = arith.addf %117, %118 : vector<8x1xf32>
    %120 = tpu.reciprocal %119 {approx = true} : vector<8x1xf32> -> vector<8x1xf32>
    %121 = arith.mulf %10, %120 : vector<8x1xf32>
    %122 = vector.broadcast %121 : vector<8x1xf32> to vector<8x32xf32>
    %123 = arith.mulf %115, %122 : vector<8x32xf32>
    %124 = arith.truncf %123 : vector<8x32xf32> to vector<8x32xbf16>
    %cst_46 = arith.constant dense<0.000000e+00> : vector<8x32xf32>
    %125 = tpu.matmul %124, %98, %cst_46 {dimension_numbers = #tpu.dot_dimension_numbers<[1], [0], [0], [1], [0, 0, 1, 1], [], []>} : vector<8x32xbf16>, vector<32x32xbf16>, vector<8x32xf32> -> vector<8x32xf32>
    %126 = arith.truncf %125 : vector<8x32xf32> to vector<8x32xbf16>
    %cst_47 = arith.constant dense<0.000000e+00> : vector<32x32xf32>
    %127 = tpu.matmul %124, %126, %cst_47 {dimension_numbers = #tpu.dot_dimension_numbers<[0], [0], [1], [1], [0, 1, 1, 1], [], []>} : vector<8x32xbf16>, vector<8x32xbf16>, vector<32x32xf32> -> vector<32x32xf32>
    %128 = arith.addf %96, %127 : vector<32x32xf32>
    %129 = vector.extract_strided_slice %25 {offsets = [0, 96], sizes = [32, 32], strides = [1, 1]} : vector<32x128xf32> to vector<32x32xf32>
    %130 = arith.truncf %129 : vector<32x32xf32> to vector<32x32xbf16>
    %131 = vector.extract_strided_slice %31 {offsets = [0, 3], sizes = [8, 1], strides = [1, 1]} : vector<8x4xf32> to vector<8x1xf32>
    %132 = vector.extract_strided_slice %28 {offsets = [3, 0], sizes = [1, 32], strides = [1, 1]} : vector<4x32xf32> to vector<1x32xf32>
    %133 = vector.broadcast %131 : vector<8x1xf32> to vector<8x32xf32>
    %134 = vector.broadcast %132 : vector<1x32xf32> to vector<8x32xf32>
    %135 = arith.addf %133, %134 : vector<8x32xf32>
    %cst_48 = arith.constant 0.000000e+00 : f32
    %136 = vector.broadcast %cst_48 : f32 to vector<8x32xf32>
    %137 = arith.cmpf ogt, %135, %136 : vector<8x32xf32>
    %cst_49 = arith.constant 2.000000e-01 : f32
    %138 = vector.broadcast %cst_49 : f32 to vector<8x32xf32>
    %139 = arith.mulf %138, %135 : vector<8x32xf32>
    %140 = arith.select %137, %135, %139 : vector<8x32xi1>, vector<8x32xf32>
    %cst_50 = arith.constant -1.000000e+30 : f32
    %141 = vector.broadcast %cst_50 : f32 to vector<8x32xf32>
    %142 = arith.select %2, %140, %141 : vector<8x32xi1>, vector<8x32xf32>
    %cst_51 = arith.constant dense<0xFF800000> : vector<8xf32>
    %143 = vector.multi_reduction <maximumf>, %142, %cst_51 [1] : vector<8x32xf32> to vector<8xf32>
    %144 = vector.shape_cast %143 : vector<8xf32> to vector<8x1xf32>
    %145 = vector.broadcast %144 : vector<8x1xf32> to vector<8x32xf32>
    %146 = arith.subf %142, %145 : vector<8x32xf32>
    %147 = math.exp %146 : vector<8x32xf32>
    %cst_52 = arith.constant dense<0.000000e+00> : vector<8xf32>
    %148 = vector.multi_reduction <add>, %147, %cst_52 [1] : vector<8x32xf32> to vector<8xf32>
    %149 = vector.shape_cast %148 : vector<8xf32> to vector<8x1xf32>
    %cst_53 = arith.constant 1.000000e-16 : f32
    %150 = vector.broadcast %cst_53 : f32 to vector<8x1xf32>
    %151 = arith.addf %149, %150 : vector<8x1xf32>
    %152 = tpu.reciprocal %151 {approx = true} : vector<8x1xf32> -> vector<8x1xf32>
    %153 = arith.mulf %10, %152 : vector<8x1xf32>
    %154 = vector.broadcast %153 : vector<8x1xf32> to vector<8x32xf32>
    %155 = arith.mulf %147, %154 : vector<8x32xf32>
    %156 = arith.truncf %155 : vector<8x32xf32> to vector<8x32xbf16>
    %cst_54 = arith.constant dense<0.000000e+00> : vector<8x32xf32>
    %157 = tpu.matmul %156, %130, %cst_54 {dimension_numbers = #tpu.dot_dimension_numbers<[1], [0], [0], [1], [0, 0, 1, 1], [], []>} : vector<8x32xbf16>, vector<32x32xbf16>, vector<8x32xf32> -> vector<8x32xf32>
    %158 = arith.truncf %157 : vector<8x32xf32> to vector<8x32xbf16>
    %cst_55 = arith.constant dense<0.000000e+00> : vector<32x32xf32>
    %159 = tpu.matmul %156, %158, %cst_55 {dimension_numbers = #tpu.dot_dimension_numbers<[0], [0], [1], [1], [0, 1, 1, 1], [], []>} : vector<8x32xbf16>, vector<8x32xbf16>, vector<32x32xf32> -> vector<32x32xf32>
    %160 = arith.addf %128, %159 : vector<32x32xf32>
    %cst_56 = arith.constant 2.500000e-01 : f32
    %161 = vector.broadcast %cst_56 : f32 to vector<32x1xf32>
    %162 = arith.mulf %18, %161 : vector<32x1xf32>
    %163 = vector.broadcast %162 : vector<32x1xf32> to vector<32x32xf32>
    %164 = arith.mulf %160, %163 : vector<32x32xf32>
    %c0_57 = arith.constant 0 : index
    %c0_58 = arith.constant 0 : index
    %165 = vector.load %arg6[%c0_57, %c0_58] : memref<1x32xf32, #tpu.memory_space<vmem>>, vector<1x32xf32>
    %166 = vector.broadcast %165 : vector<1x32xf32> to vector<32x32xf32>
    %167 = arith.addf %164, %166 : vector<32x32xf32>
    %cst_59 = arith.constant 0.000000e+00 : f32
    %168 = vector.broadcast %cst_59 : f32 to vector<32x32xf32>
    %169 = arith.cmpf ogt, %167, %168 : vector<32x32xf32>
    %cst_60 = arith.constant 2.000000e-01 : f32
    %170 = vector.broadcast %cst_60 : f32 to vector<32x32xf32>
    %171 = arith.mulf %170, %167 : vector<32x32xf32>
    %172 = arith.select %169, %167, %171 : vector<32x32xi1>, vector<32x32xf32>
    %173 = arith.truncf %172 : vector<32x32xf32> to vector<32x32xbf16>
    %c0_61 = arith.constant 0 : index
    %c0_62 = arith.constant 0 : index
    %174 = vector.load %arg7[%c0_61, %c0_62] : memref<32x32xf32, #tpu.memory_space<vmem>>, vector<32x32xf32>
    %175 = arith.truncf %174 : vector<32x32xf32> to vector<32x32xbf16>
    %cst_63 = arith.constant dense<0.000000e+00> : vector<32x32xf32>
    %176 = tpu.matmul %173, %175, %cst_63 {dimension_numbers = #tpu.dot_dimension_numbers<[1], [0], [0], [1], [0, 0, 1, 1], [], []>} : vector<32x32xbf16>, vector<32x32xbf16>, vector<32x32xf32> -> vector<32x32xf32>
    %c0_64 = arith.constant 0 : index
    %c0_65 = arith.constant 0 : index
    %177 = vector.load %arg8[%c0_64, %c0_65] : memref<32x1xf32, #tpu.memory_space<vmem>>, vector<32x1xf32>
    %178 = arith.truncf %177 : vector<32x1xf32> to vector<32x1xbf16>
    %cst_66 = arith.constant dense<0.000000e+00> : vector<1x32xf32>
    %179 = tpu.matmul %178, %173, %cst_66 {dimension_numbers = #tpu.dot_dimension_numbers<[0], [1], [1], [0], [0, 1, 1, 0], [], []>} : vector<32x1xbf16>, vector<32x32xbf16>, vector<1x32xf32> -> vector<1x32xf32>
    %c0_67 = arith.constant 0 : index
    %c0_68 = arith.constant 0 : index
    %180 = vector.load %arg9[%c0_67, %c0_68] : memref<32x1xf32, #tpu.memory_space<vmem>>, vector<32x1xf32>
    %181 = arith.truncf %180 : vector<32x1xf32> to vector<32x1xbf16>
    %cst_69 = arith.constant dense<0.000000e+00> : vector<8x1xf32>
    %182 = tpu.matmul %20, %181, %cst_69 {dimension_numbers = #tpu.dot_dimension_numbers<[1], [0], [0], [1], [0, 0, 1, 1], [], []>} : vector<8x32xbf16>, vector<32x1xbf16>, vector<8x1xf32> -> vector<8x1xf32>
    %cst_70 = arith.constant 0.000000e+00 : f32
    %183 = vector.broadcast %cst_70 : f32 to vector<32x32xf32>
    %184 = arith.truncf %176 : vector<32x32xf32> to vector<32x32xbf16>
    %185 = vector.broadcast %182 : vector<8x1xf32> to vector<8x32xf32>
    %186 = vector.broadcast %179 : vector<1x32xf32> to vector<8x32xf32>
    %187 = arith.addf %185, %186 : vector<8x32xf32>
    %cst_71 = arith.constant 0.000000e+00 : f32
    %188 = vector.broadcast %cst_71 : f32 to vector<8x32xf32>
    %189 = arith.cmpf ogt, %187, %188 : vector<8x32xf32>
    %cst_72 = arith.constant 2.000000e-01 : f32
    %190 = vector.broadcast %cst_72 : f32 to vector<8x32xf32>
    %191 = arith.mulf %190, %187 : vector<8x32xf32>
    %192 = arith.select %189, %187, %191 : vector<8x32xi1>, vector<8x32xf32>
    %cst_73 = arith.constant -1.000000e+30 : f32
    %193 = vector.broadcast %cst_73 : f32 to vector<8x32xf32>
    %194 = arith.select %2, %192, %193 : vector<8x32xi1>, vector<8x32xf32>
    %cst_74 = arith.constant dense<0xFF800000> : vector<8xf32>
    %195 = vector.multi_reduction <maximumf>, %194, %cst_74 [1] : vector<8x32xf32> to vector<8xf32>
    %196 = vector.shape_cast %195 : vector<8xf32> to vector<8x1xf32>
    %197 = vector.broadcast %196 : vector<8x1xf32> to vector<8x32xf32>
    %198 = arith.subf %194, %197 : vector<8x32xf32>
    %199 = math.exp %198 : vector<8x32xf32>
    %cst_75 = arith.constant dense<0.000000e+00> : vector<8xf32>
    %200 = vector.multi_reduction <add>, %199, %cst_75 [1] : vector<8x32xf32> to vector<8xf32>
    %201 = vector.shape_cast %200 : vector<8xf32> to vector<8x1xf32>
    %cst_76 = arith.constant 1.000000e-16 : f32
    %202 = vector.broadcast %cst_76 : f32 to vector<8x1xf32>
    %203 = arith.addf %201, %202 : vector<8x1xf32>
    %204 = tpu.reciprocal %203 {approx = true} : vector<8x1xf32> -> vector<8x1xf32>
    %205 = arith.mulf %10, %204 : vector<8x1xf32>
    %206 = vector.broadcast %205 : vector<8x1xf32> to vector<8x32xf32>
    %207 = arith.mulf %199, %206 : vector<8x32xf32>
    %208 = arith.truncf %207 : vector<8x32xf32> to vector<8x32xbf16>
    %cst_77 = arith.constant dense<0.000000e+00> : vector<8x32xf32>
    %209 = tpu.matmul %208, %184, %cst_77 {dimension_numbers = #tpu.dot_dimension_numbers<[1], [0], [0], [1], [0, 0, 1, 1], [], []>} : vector<8x32xbf16>, vector<32x32xbf16>, vector<8x32xf32> -> vector<8x32xf32>
    %210 = arith.truncf %209 : vector<8x32xf32> to vector<8x32xbf16>
    %cst_78 = arith.constant dense<0.000000e+00> : vector<32x32xf32>
    %211 = tpu.matmul %208, %210, %cst_78 {dimension_numbers = #tpu.dot_dimension_numbers<[0], [0], [1], [1], [0, 1, 1, 1], [], []>} : vector<8x32xbf16>, vector<8x32xbf16>, vector<32x32xf32> -> vector<32x32xf32>
    %212 = arith.addf %183, %211 : vector<32x32xf32>
    %cst_79 = arith.constant 1.000000e+00 : f32
    %213 = vector.broadcast %cst_79 : f32 to vector<32x1xf32>
    %214 = arith.mulf %18, %213 : vector<32x1xf32>
    %215 = vector.broadcast %214 : vector<32x1xf32> to vector<32x32xf32>
    %216 = arith.mulf %212, %215 : vector<32x32xf32>
    %c0_80 = arith.constant 0 : index
    %c0_81 = arith.constant 0 : index
    %217 = vector.load %arg10[%c0_80, %c0_81] : memref<1x32xf32, #tpu.memory_space<vmem>>, vector<1x32xf32>
    %218 = vector.broadcast %217 : vector<1x32xf32> to vector<32x32xf32>
    %219 = arith.addf %216, %218 : vector<32x32xf32>
    %cst_82 = arith.constant 0.000000e+00 : f32
    %220 = vector.broadcast %cst_82 : f32 to vector<32x32xf32>
    %221 = arith.cmpf ogt, %219, %220 : vector<32x32xf32>
    %cst_83 = arith.constant 2.000000e-01 : f32
    %222 = vector.broadcast %cst_83 : f32 to vector<32x32xf32>
    %223 = arith.mulf %222, %219 : vector<32x32xf32>
    %224 = arith.select %221, %219, %223 : vector<32x32xi1>, vector<32x32xf32>
    %c0_84 = arith.constant 0 : index
    %c0_85 = arith.constant 0 : index
    %225 = vector.load %arg11[%c0_84, %c0_85] : memref<32x32xf32, #tpu.memory_space<vmem>>, vector<32x32xf32>
    tpu.vector_store %arg11[%c0_84, %c0_85], %224 {strides = array<i32>} : memref<32x32xf32, #tpu.memory_space<vmem>>, vector<32x32xf32>,
    return
  }
}

</mosaic_0001>

<llo_original>
// kernel: sthan_forward.1
$region0: #{sthan_forward.1}
  #allocation0 [shape = 'u32[]', space=smem, size = 0x4, offset = 0x4, fixed_abs, tag = 'smem constant byte address 0x4 - core index']
  #allocation1 [shape = 'u32[144,128]{1,0:T(1,128)}', space=vmem, size = 0x12000, scoped, tag = 'internal scratch']
  %s0 = inlined_call_operand.vmem [shape: f32[32,32], index: 0, kind: input, shape index: {}]
  %s1 = inlined_call_operand.vmem [shape: f32[8,32], index: 1, kind: input, shape index: {}]
  %s2 = inlined_call_operand.vmem [shape: f32[8,32], index: 2, kind: input, shape index: {}]
  %s3 = inlined_call_operand.vmem [shape: f32[32,128], index: 3, kind: input, shape index: {}]
  %s4 = inlined_call_operand.vmem [shape: f32[32,4], index: 4, kind: input, shape index: {}]
  %s5 = inlined_call_operand.vmem [shape: f32[32,4], index: 5, kind: input, shape index: {}]
  %s6 = inlined_call_operand.vmem [shape: f32[1,32], index: 6, kind: input, shape index: {}]
  %s7 = inlined_call_operand.vmem [shape: f32[32,32], index: 7, kind: input, shape index: {}]
  %s8 = inlined_call_operand.vmem [shape: f32[32,1], index: 8, kind: input, shape index: {}]
  %s9 = inlined_call_operand.vmem [shape: f32[32,1], index: 9, kind: input, shape index: {}]
  %s10 = inlined_call_operand.vmem [shape: f32[1,32], index: 10, kind: input, shape index: {}]
  %s11 = inlined_call_operand.hbm [shape: f32[32,32], index: 11, kind: output, shape index: {}]
  %s12 = sld [smem:[#allocation0]]
  $region54: #{sthan_forward.1} parent=0
    _
  %s14 = ssub.s32 1, %s12
  %s15 = scalar_select 0, %s14, %s12
  $region1: #{sthan_forward.1} parent=0
    #allocation2 [shape = 'u8[16384]{0}', space=vmem, size = 0x4000, scoped, tag = 'output window, operand 0, single buffered']
    #allocation3 [shape = 's32[1]{0}', space=sflag, size = 0x4, scoped, tag = 'scoped memory for sthan_forward.1']
    %16 = vsyncpa [#allocation3], 0
    // Predicated region
    $region2: #{sthan_forward.1} parent=1 // pred_check
      _
    $region3: #{sthan_forward.1} parent=1 // pred_check_branch
      %18 = sbr.rel (0) target = $region5
    $region4: #{sthan_forward.1} parent=1 // pred_region
      _
    $region5: #{sthan_forward.1} parent=1 // pred_fallthru
      _
    // Predicated region
    $region6: #{sthan_forward.1} parent=1 // pred_check
      _
    $region7: #{sthan_forward.1} parent=1 // pred_check_branch
      %20 = sbr.rel (0) target = $region9
    $region8: #{sthan_forward.1} parent=1 // pred_region
      _
    $region9: #{sthan_forward.1} parent=1 // pred_fallthru
      _
    // Predicated region
    $region10: #{sthan_forward.1} parent=1 // pred_check
      _
    $region11: #{sthan_forward.1} parent=1 // pred_check_branch
      %22 = sbr.rel (0) target = $region13
    $region12: #{sthan_forward.1} parent=1 // pred_region
      _
    $region13: #{sthan_forward.1} parent=1 // pred_fallthru
      _
    // Predicated region
    $region14: #{sthan_forward.1} parent=1 // pred_check
      _
    $region15: #{sthan_forward.1} parent=1 // pred_check_branch
      %24 = sbr.rel (0) target = $region17
    $region16: #{sthan_forward.1} parent=1 // pred_region
      _
    $region17: #{sthan_forward.1} parent=1 // pred_fallthru
      _
    // Predicated region
    $region18: #{sthan_forward.1} parent=1 // pred_check
      _
    $region19: #{sthan_forward.1} parent=1 // pred_check_branch
      %26 = sbr.rel (0) target = $region21
    $region20: #{sthan_forward.1} parent=1 // pred_region
      _
    $region21: #{sthan_forward.1} parent=1 // pred_fallthru
      _
    // Predicated region
    $region22: #{sthan_forward.1} parent=1 // pred_check
      _
    $region23: #{sthan_forward.1} parent=1 // pred_check_branch
      %28 = sbr.rel (0) target = $region25
    $region24: #{sthan_forward.1} parent=1 // pred_region
      _
    $region25: #{sthan_forward.1} parent=1 // pred_fallthru
      _
    // Predicated region
    $region26: #{sthan_forward.1} parent=1 // pred_check
      _
    $region27: #{sthan_forward.1} parent=1 // pred_check_branch
      %30 = sbr.rel (0) target = $region29
    $region28: #{sthan_forward.1} parent=1 // pred_region
      _
    $region29: #{sthan_forward.1} parent=1 // pred_fallthru
      _
    // Predicated region
    $region30: #{sthan_forward.1} parent=1 // pred_check
      _
    $region31: #{sthan_forward.1} parent=1 // pred_check_branch
      %32 = sbr.rel (0) target = $region33
    $region32: #{sthan_forward.1} parent=1 // pred_region
      _
    $region33: #{sthan_forward.1} parent=1 // pred_fallthru
      _
    // Predicated region
    $region34: #{sthan_forward.1} parent=1 // pred_check
      _
    $region35: #{sthan_forward.1} parent=1 // pred_check_branch
      %34 = sbr.rel (0) target = $region37
    $region36: #{sthan_forward.1} parent=1 // pred_region
      _
    $region37: #{sthan_forward.1} parent=1 // pred_fallthru
      _
    // Predicated region
    $region38: #{sthan_forward.1} parent=1 // pred_check
      _
    $region39: #{sthan_forward.1} parent=1 // pred_check_branch
      %36 = sbr.rel (0) target = $region41
    $region40: #{sthan_forward.1} parent=1 // pred_region
      _
    $region41: #{sthan_forward.1} parent=1 // pred_fallthru
      _
    // Predicated region
    $region42: #{sthan_forward.1} parent=1 // pred_check
      _
    $region43: #{sthan_forward.1} parent=1 // pred_check_branch
      %38 = sbr.rel (0) target = $region45
    $region44: #{sthan_forward.1} parent=1 // pred_region
      _
    $region45: #{sthan_forward.1} parent=1 // pred_fallthru
      _
    %v40 = vld [vmem:[%s1] sm:$0xff]
    %vm41 = vcmp.gt.f32.partialorder %v40, 0.0
    %vm42 = vcmask 261120
    %v43 = vsel %vm42, %v40, 0.0
    %44 = vadd.xlane.f32.xlu0 %v43
    %v45 = vpop.xlane.xlu0 %44
    %vm46 = vcmp.gt.f32.partialorder %v45, 0.0
    %v47 = vrcp.pop %v45
    %v48 = vmul.f32 1.0, %v47
    %v49 = vsel %vm46, %v48, 0.0
    %50 = vxpose.xlu0.b32.start [1/16] %v40, 128
    %51 = vxpose.xlu0.b32.cont [2/16] 0.0, 128
    %52 = vxpose.xlu0.b32.cont [3/16] 0.0, 128
    %53 = vxpose.xlu0.b32.cont [4/16] 0.0, 128
    %54 = vxpose.xlu0.b32.cont [5/16] 0.0, 128
    %55 = vxpose.xlu0.b32.cont [6/16] 0.0, 128
    %56 = vxpose.xlu0.b32.cont [7/16] 0.0, 128
    %57 = vxpose.xlu0.b32.cont [8/16] 0.0, 128
    %58 = vxpose.xlu0.b32.cont [9/16] 0.0, 128
    %59 = vxpose.xlu0.b32.cont [10/16] 0.0, 128
    %60 = vxpose.xlu0.b32.cont [11/16] 0.0, 128
    %61 = vxpose.xlu0.b32.cont [12/16] 0.0, 128
    %62 = vxpose.xlu0.b32.cont [13/16] 0.0, 128
    %63 = vxpose.xlu0.b32.cont [14/16] 0.0, 128
    %64 = vxpose.xlu0.b32.cont [15/16] 0.0, 128
    %65 = vxpose.xlu0.b32.end [16/16] 0.0, 128
    %v66 = vpop.trf.xlu0
    %v67 = vpop.trf.xlu0
    %v68 = vpop.trf.xlu0
    %v69 = vpop.trf.xlu0
    %v70 = vpop.trf.xlu0
    %v71 = vpop.trf.xlu0
    %v72 = vpop.trf.xlu0
    %v73 = vpop.trf.xlu0
    %v74 = vpop.trf.xlu0
    %v75 = vpop.trf.xlu0
    %v76 = vpop.trf.xlu0
    %v77 = vpop.trf.xlu0
    %v78 = vpop.trf.xlu0
    %v79 = vpop.trf.xlu0
    %v80 = vpop.trf.xlu0
    %v81 = vpop.trf.xlu0
    %vm82 = vcmask 64512
    %v84 = vsel %vm82, %v66, 0
    %v87 = vsel %vm82, %v67, 0
    %v90 = vsel %vm82, %v68, 0
    %v93 = vsel %vm82, %v69, 0
    %95 = vmatprep.subr.mxu0 0.0
    %96 = vmatpush1.msra.mxu0 0.0
    %97 = vmatprep.subr.mxu0 0.0
    %98 = vmatpush1.msra.mxu0 0.0
    %99 = vmatprep.subr.mxu0 0.0
    %100 = vmatpush1.msra.mxu0 0.0
    %101 = vmatprep.subr.mxu0 0.0
    %102 = vmatpush1.msra.mxu0 0.0
    %103 = vmatprep.subr.mxu0 0.0
    %104 = vmatpush1.msra.mxu0 0.0
    %105 = vmatprep.subr.mxu0 0.0
    %106 = vmatpush1.msra.mxu0 0.0
    %107 = vmatprep.subr.mxu0 0.0
    %108 = vmatpush1.msra.mxu0 0.0
    %109 = vmatprep.subr.mxu0 0.0
    %110 = vmatpush1.msra.mxu0 0.0
    %111 = vmatprep.subr.mxu0 0.0
    %112 = vmatpush1.msra.mxu0 0.0
    %113 = vmatprep.subr.mxu0 0.0
    %114 = vmatpush1.msra.mxu0 0.0
    %115 = vmatprep.subr.mxu0 0.0
    %116 = vmatpush1.msra.mxu0 0.0
    %117 = vmatprep.subr.mxu0 0.0
    %118 = vmatpush1.msra.mxu0 0.0
    %119 = vmatprep.subr.mxu0 0.0
    %120 = vmatpush1.msra.mxu0 0.0
    %121 = vmatprep.subr.mxu0 0.0
    %122 = vmatpush1.msra.mxu0 0.0
    %123 = vmatprep.subr.mxu0 0.0
    %124 = vmatpush1.msra.mxu0 0.0
    %125 = vmatprep.subr.mxu0 0.0
    %126 = vmatpush1.msra.mxu0 1.0
    %127 = vmatprep.subr.mxu0 0.0
    %128 = vmatpush2.msra.mxu0 0.0
    %129 = vmatprep.subr.mxu0 0.0
    %130 = vmatpush2.msra.mxu0 0.0
    %131 = vmatprep.subr.mxu0 0.0
    %132 = vmatpush2.msra.mxu0 0.0
    %133 = vmatprep.subr.mxu0 0.0
    %134 = vmatpush2.msra.mxu0 0.0
    %135 = vmatprep.subr.mxu0 0.0
    %136 = vmatpush2.msra.mxu0 0.0
    %137 = vmatprep.subr.mxu0 0.0
    %138 = vmatpush2.msra.mxu0 0.0
    %139 = vmatprep.subr.mxu0 0.0
    %140 = vmatpush2.msra.mxu0 0.0
    %141 = vmatprep.subr.mxu0 0.0
    %142 = vmatpush2.msra.mxu0 0.0
    %143 = vmatprep.subr.mxu0 0.0
    %144 = vmatpush2.msra.mxu0 0.0
    %145 = vmatprep.subr.mxu0 0.0
    %146 = vmatpush2.msra.mxu0 0.0
    %147 = vmatprep.subr.mxu0 0.0
    %148 = vmatpush2.msra.mxu0 0.0
    %149 = vmatprep.subr.mxu0 0.0
    %150 = vmatpush2.msra.mxu0 0.0
    %151 = vmatprep.subr.mxu0 0.0
    %152 = vmatpush2.msra.mxu0 0.0
    %153 = vmatprep.subr.mxu0 0.0
    %154 = vmatpush2.msra.mxu0 0.0
    %155 = vmatprep.subr.mxu0 0.0
    %156 = vmatpush2.msra.mxu0 0.0
    %157 = vmatprep.subr.mxu0 0.0
    %158 = vmatpush2.msra.mxu0 0.0
    %159 = vmatprep.mubr.f32.mxu0 0.0
    %160 = vmatmul.mubr.f32.gmra.mxu0 %v84
    %v161 = vpop.f32.mrf.mxu0
    %v162 = vadd.f32 0.0, %v161
    %v163 = vpop.f32.mrf.mxu0
    %164 = vmatprep.mubr.f32.mxu0 0.0
    %165 = vmatmul.mubr.f32.gmra.mxu0 %v87
    %v166 = vpop.f32.mrf.mxu0
    %v167 = vadd.f32 0.0, %v166
    %v168 = vpop.f32.mrf.mxu0
    %169 = vmatprep.mubr.f32.mxu0 0.0
    %170 = vmatmul.mubr.f32.gmra.mxu0 %v90
    %v171 = vpop.f32.mrf.mxu0
    %v172 = vadd.f32 0.0, %v171
    %v173 = vpop.f32.mrf.mxu0
    %174 = vmatprep.mubr.f32.mxu0 0.0
    %175 = vmatmul.mubr.f32.gmra.mxu0 %v93
    %v176 = vpop.f32.mrf.mxu0
    %v177 = vadd.f32 0.0, %v176
    %v178 = vpop.f32.mrf.mxu0
    %179 = vdwg.mxu0
    %vm180 = vcmp.gt.f32.partialorder %v162, 0.0
    %vm181 = vcmp.gt.f32.partialorder %v167, 0.0
    %vm182 = vcmp.gt.f32.partialorder %v172, 0.0
    %vm183 = vcmp.gt.f32.partialorder %v177, 0.0
    %v184 = vrcp.pop %v162
    %v185 = vmul.f32 1.0, %v184
    %v186 = vrcp.pop %v167
    %v187 = vmul.f32 1.0, %v186
    %v188 = vrcp.pop %v172
    %v189 = vmul.f32 1.0, %v188
    %v190 = vrcp.pop %v177
    %v191 = vmul.f32 1.0, %v190
    %v192 = vsel %vm180, %v185, 0.0
    %v193 = vsel %vm181, %v187, 0.0
    %v194 = vsel %vm182, %v189, 0.0
    %v195 = vsel %vm183, %v191, 0.0
    %v196 = vld [vmem:[%s2] sm:$0xff]
    %v197 = vpack.c.bf16 %v196, %v196
    %v198 = vld [vmem:[%s0] sm:$0xff]
    %v199 = vld [vmem:[%s0 + $0x8] sm:$0xff]
    %v200 = vld [vmem:[%s0 + $0x10] sm:$0xff]
    %v201 = vld [vmem:[%s0 + $0x18] sm:$0xff]
    %v202 = vpack.c.bf16 %v199, %v198
    %v203 = vpack.c.bf16 %v201, %v200
    %v204 = vld [vmem:[%s3] sm:$0xff]
    %v205 = vld [vmem:[%s3 + $0x8] sm:$0xff]
    %v206 = vld [vmem:[%s3 + $0x10] sm:$0xff]
    %v207 = vld [vmem:[%s3 + $0x18] sm:$0xff]
    %v208 = vpack.c.bf16 %v205, %v204
    %v209 = vpack.c.bf16 %v207, %v206
    %v211 = vsel %vm42, %v202, 0
    %v214 = vsel %vm42, %v203, 0
    %216 = vmatprep.subr.bf16.mxu0 0
    %217 = vmatpush1.bf16.msra.mxu0 0
    %218 = vmatprep.subr.bf16.mxu0 0
    %219 = vmatpush1.bf16.msra.mxu0 0
    %220 = vmatprep.subr.bf16.mxu0 0
    %221 = vmatpush1.bf16.msra.mxu0 0
    %222 = vmatprep.subr.bf16.mxu0 0
    %223 = vmatpush1.bf16.msra.mxu0 0
    %224 = vmatprep.subr.bf16.mxu0 0
    %225 = vmatpush1.bf16.msra.mxu0 0
    %226 = vmatprep.subr.bf16.mxu0 0
    %227 = vmatpush1.bf16.msra.mxu0 0
    %228 = vmatprep.subr.bf16.mxu0 0
    %229 = vmatpush1.bf16.msra.mxu0 %v209
    %230 = vmatprep.subr.bf16.mxu0 0
    %231 = vmatpush1.bf16.msra.mxu0 %v208
    %232 = vmatprep.subr.bf16.mxu0 0
    %233 = vmatpush2.bf16.msra.mxu0 0
    %234 = vmatprep.subr.bf16.mxu0 0
    %235 = vmatpush2.bf16.msra.mxu0 0
    %236 = vmatprep.subr.bf16.mxu0 0
    %237 = vmatpush2.bf16.msra.mxu0 0
    %238 = vmatprep.subr.bf16.mxu0 0
    %239 = vmatpush2.bf16.msra.mxu0 0
    %240 = vmatprep.subr.bf16.mxu0 0
    %241 = vmatpush2.bf16.msra.mxu0 0
    %242 = vmatprep.subr.bf16.mxu0 0
    %243 = vmatpush2.bf16.msra.mxu0 0
    %244 = vmatprep.subr.bf16.mxu0 0
    %245 = vmatpush2.bf16.msra.mxu0 0
    %246 = vmatprep.subr.bf16.mxu0 0
    %247 = vmatpush2.bf16.msra.mxu0 0
    %248 = vmatprep.mubr.bf16.mxu0 0
    %249 = vmatmul.mubr.bf16.gmra.mxu0 %v211
    %v250 = vpop.f32.mrf.mxu0
    %v251 = vadd.f32 0.0, %v250
    %v252 = vpop.f32.mrf.mxu0
    %v253 = vpop.f32.mrf.mxu0
    %v254 = vadd.f32 0.0, %v253
    %v255 = vpop.f32.mrf.mxu0
    %256 = vmatprep.mubr.bf16.mxu0 0
    %257 = vmatmul.mubr.bf16.gmra.mxu0 %v214
    %v258 = vpop.f32.mrf.mxu0
    %v259 = vadd.f32 0.0, %v258
    %v260 = vpop.f32.mrf.mxu0
    %v261 = vpop.f32.mrf.mxu0
    %v262 = vadd.f32 0.0, %v261
    %v263 = vpop.f32.mrf.mxu0
    %264 = vdwg.mxu0
    %v265 = vld [vmem:[%s4] sm:$0xff]
    %v266 = vld [vmem:[%s4 + $0x8] sm:$0xff]
    %v267 = vld [vmem:[%s4 + $0x10] sm:$0xff]
    %v268 = vld [vmem:[%s4 + $0x18] sm:$0xff]
    %v269 = vpack.c.bf16 %v266, %v265
    %v270 = vpack.c.bf16 %v268, %v267
    %271 = vxpose.xlu0.c.b16.start [1/8] %v269, 128
    %272 = vxpose.xlu0.c.b16.cont [2/8] %v270, 128
    %273 = vxpose.xlu0.c.b16.cont [3/8] 0, 128
    %274 = vxpose.xlu0.c.b16.cont [4/8] 0, 128
    %275 = vxpose.xlu0.c.b16.cont [5/8] 0, 128
    %276 = vxpose.xlu0.c.b16.cont [6/8] 0, 128
    %277 = vxpose.xlu0.c.b16.cont [7/8] 0, 128
    %278 = vxpose.xlu0.c.b16.end [8/8] 0, 128
    %v279 = vpop.trf.xlu0
    %v280 = vpop.trf.xlu0
    %v281 = vpop.trf.xlu0
    %v282 = vpop.trf.xlu0
    %v283 = vpop.trf.xlu0
    %v284 = vpop.trf.xlu0
    %v285 = vpop.trf.xlu0
    %v286 = vpop.trf.xlu0
    %v288 = vsel %vm42, %v279, 0
    %290 = vmatprep.subr.bf16.mxu0 0
    %291 = vmatpush1.bf16.xpose.msra.mxu0 0
    %292 = vmatprep.subr.bf16.mxu0 0
    %293 = vmatpush1.bf16.xpose.msra.mxu0 0
    %294 = vmatprep.subr.bf16.mxu0 0
    %295 = vmatpush1.bf16.xpose.msra.mxu0 0
    %296 = vmatprep.subr.bf16.mxu0 0
    %297 = vmatpush1.bf16.xpose.msra.mxu0 0
    %298 = vmatprep.subr.bf16.mxu0 0
    %299 = vmatpush1.bf16.xpose.msra.mxu0 0
    %300 = vmatprep.subr.bf16.mxu0 0
    %301 = vmatpush1.bf16.xpose.msra.mxu0 0
    %302 = vmatprep.subr.bf16.mxu0 0
    %303 = vmatpush1.bf16.xpose.msra.mxu0 %v214
    %304 = vmatprep.subr.bf16.mxu0 0
    %305 = vmatpush1.bf16.xpose.msra.mxu0 %v211
    %306 = vmatprep.subr.bf16.mxu0 0
    %307 = vmatpush2.bf16.xpose.msra.mxu0 0
    %308 = vmatprep.subr.bf16.mxu0 0
    %309 = vmatpush2.bf16.xpose.msra.mxu0 0
    %310 = vmatprep.subr.bf16.mxu0 0
    %311 = vmatpush2.bf16.xpose.msra.mxu0 0
    %312 = vmatprep.subr.bf16.mxu0 0
    %313 = vmatpush2.bf16.xpose.msra.mxu0 0
    %314 = vmatprep.subr.bf16.mxu0 0
    %315 = vmatpush2.bf16.xpose.msra.mxu0 0
    %316 = vmatprep.subr.bf16.mxu0 0
    %317 = vmatpush2.bf16.xpose.msra.mxu0 0
    %318 = vmatprep.subr.bf16.mxu0 0
    %319 = vmatpush2.bf16.xpose.msra.mxu0 0
    %320 = vmatprep.subr.bf16.mxu0 0
    %321 = vmatpush2.bf16.xpose.msra.mxu0 0
    %322 = vmatprep.mubr.bf16.mxu0 0
    %323 = vmatmul.mubr.bf16.gmra.mxu0 %v288
    %v324 = vpop.f32.mrf.mxu0
    %v325 = vadd.f32 0.0, %v324
    %v326 = vpop.f32.mrf.mxu0
    %v327 = vpop.f32.mrf.mxu0
    %v328 = vpop.f32.mrf.mxu0
    %329 = vdwg.mxu0
    %v330 = vld [vmem:[%s5] sm:$0xff]
    %v331 = vld [vmem:[%s5 + $0x8] sm:$0xff]
    %v332 = vld [vmem:[%s5 + $0x10] sm:$0xff]
    %v333 = vld [vmem:[%s5 + $0x18] sm:$0xff]
    %v334 = vpack.c.bf16 %v331, %v330
    %v335 = vpack.c.bf16 %v333, %v332
    %v337 = vsel %vm42, %v197, 0
    %339 = vmatprep.subr.bf16.mxu0 0
    %340 = vmatpush1.bf16.msra.mxu0 0
    %341 = vmatprep.subr.bf16.mxu0 0
    %342 = vmatpush1.bf16.msra.mxu0 0
    %343 = vmatprep.subr.bf16.mxu0 0
    %344 = vmatpush1.bf16.msra.mxu0 0
    %345 = vmatprep.subr.bf16.mxu0 0
    %346 = vmatpush1.bf16.msra.mxu0 0
    %347 = vmatprep.subr.bf16.mxu0 0
    %348 = vmatpush1.bf16.msra.mxu0 0
    %349 = vmatprep.subr.bf16.mxu0 0
    %350 = vmatpush1.bf16.msra.mxu0 0
    %351 = vmatprep.subr.bf16.mxu0 0
    %352 = vmatpush1.bf16.msra.mxu0 %v335
    %353 = vmatprep.subr.bf16.mxu0 0
    %354 = vmatpush1.bf16.msra.mxu0 %v334
    %355 = vmatprep.subr.bf16.mxu0 0
    %356 = vmatpush2.bf16.msra.mxu0 0
    %357 = vmatprep.subr.bf16.mxu0 0
    %358 = vmatpush2.bf16.msra.mxu0 0
    %359 = vmatprep.subr.bf16.mxu0 0
    %360 = vmatpush2.bf16.msra.mxu0 0
    %361 = vmatprep.subr.bf16.mxu0 0
    %362 = vmatpush2.bf16.msra.mxu0 0
    %363 = vmatprep.subr.bf16.mxu0 0
    %364 = vmatpush2.bf16.msra.mxu0 0
    %365 = vmatprep.subr.bf16.mxu0 0
    %366 = vmatpush2.bf16.msra.mxu0 0
    %367 = vmatprep.subr.bf16.mxu0 0
    %368 = vmatpush2.bf16.msra.mxu0 0
    %369 = vmatprep.subr.bf16.mxu0 0
    %370 = vmatpush2.bf16.msra.mxu0 0
    %371 = vmatprep.mubr.bf16.mxu0 0
    %372 = vmatmul.mubr.bf16.gmra.mxu0 %v337
    %v373 = vpop.f32.mrf.mxu0
    %v374 = vadd.f32 0.0, %v373
    %v375 = vpop.f32.mrf.mxu0
    %v376 = vpop.f32.mrf.mxu0
    %v377 = vpop.f32.mrf.mxu0
    %378 = vdwg.mxu0
    %v379 = vpack.c.bf16 %v254, %v251
    %v380 = vpack.c.bf16 %v262, %v259
    %382 = vset.pattern.permute.xlu0 0
    %383 = vperm.xlu0 %382, %v374
    %v384 = vpop.permute.xlu0 %383
    %v386 = vlaneseq
    %v387 = vshrl.u32 %v386, 7
    %v388 = vsub.s32 0, %v387
    %v389 = vrot.slane %v325, %v388
    %v390 = vadd.f32 %v384, %v389
    %vm391 = vcmp.gt.f32.partialorder %v390, 0.0
    %v392 = vmul.f32 %v390, 0.2
    %v393 = vsel %vm391, %v390, %v392
    %v394 = vsel %vm41, %v393, -1e+30
    %v395 = vsel %vm42, %v394, -inf
    %396 = vmax.xlane.f32.xlu0 %v395
    %v397 = vpop.xlane.xlu0 %396
    %v398 = vsub.f32 %v394, %v397
    %v399 = vmul.f32 %v398, 1.442695
    %v400 = vpow.pop %v399
    %v401 = vsel %vm42, %v400, 0.0
    %402 = vadd.xlane.f32.xlu0 %v401
    %v403 = vpop.xlane.xlu0 %402
    %v404 = vadd.f32 %v403, 1e-16
    %v405 = vrcp.pop %v404
    %v406 = vmul.f32 %v49, %v405
    %v407 = vmul.f32 %v400, %v406
    %v408 = vpack.c.bf16 %v407, %v407
    %v410 = vsel %vm42, %v408, 0
    %412 = vmatprep.subr.bf16.mxu0 0
    %413 = vmatpush1.bf16.msra.mxu0 0
    %414 = vmatprep.subr.bf16.mxu0 0
    %415 = vmatpush1.bf16.msra.mxu0 0
    %416 = vmatprep.subr.bf16.mxu0 0
    %417 = vmatpush1.bf16.msra.mxu0 0
    %418 = vmatprep.subr.bf16.mxu0 0
    %419 = vmatpush1.bf16.msra.mxu0 0
    %420 = vmatprep.subr.bf16.mxu0 0
    %421 = vmatpush1.bf16.msra.mxu0 0
    %422 = vmatprep.subr.bf16.mxu0 0
    %423 = vmatpush1.bf16.msra.mxu0 0
    %424 = vmatprep.subr.bf16.mxu0 0
    %425 = vmatpush1.bf16.msra.mxu0 %v380
    %426 = vmatprep.subr.bf16.mxu0 0
    %427 = vmatpush1.bf16.msra.mxu0 %v379
    %428 = vmatprep.subr.bf16.mxu0 0
    %429 = vmatpush2.bf16.msra.mxu0 0
    %430 = vmatprep.subr.bf16.mxu0 0
    %431 = vmatpush2.bf16.msra.mxu0 0
    %432 = vmatprep.subr.bf16.mxu0 0
    %433 = vmatpush2.bf16.msra.mxu0 0
    %434 = vmatprep.subr.bf16.mxu0 0
    %435 = vmatpush2.bf16.msra.mxu0 0
    %436 = vmatprep.subr.bf16.mxu0 0
    %437 = vmatpush2.bf16.msra.mxu0 0
    %438 = vmatprep.subr.bf16.mxu0 0
    %439 = vmatpush2.bf16.msra.mxu0 0
    %440 = vmatprep.subr.bf16.mxu0 0
    %441 = vmatpush2.bf16.msra.mxu0 0
    %442 = vmatprep.subr.bf16.mxu0 0
    %443 = vmatpush2.bf16.msra.mxu0 0
    %444 = vmatprep.mubr.bf16.mxu0 0
    %445 = vmatmul.mubr.bf16.gmra.mxu0 %v410
    %v446 = vpop.f32.mrf.mxu0
    %v447 = vadd.f32 0.0, %v446
    %v448 = vpop.f32.mrf.mxu0
    %v449 = vpop.f32.mrf.mxu0
    %v450 = vpop.f32.mrf.mxu0
    %451 = vdwg.mxu0
    %v452 = vpack.c.bf16 %v447, %v447
    %453 = vset.pattern.permute.xlu0 1
    %454 = vperm.xlu0 %453, %v374
    %v455 = vpop.permute.xlu0 %454
    %v457 = vlaneseq
    %v458 = vshrl.u32 %v457, 7
    %v459 = vsub.s32 1, %v458
    %v460 = vrot.slane %v325, %v459
    %v461 = vadd.f32 %v455, %v460
    %vm462 = vcmp.gt.f32.partialorder %v461, 0.0
    %v463 = vmul.f32 %v461, 0.2
    %v464 = vsel %vm462, %v461, %v463
    %v465 = vsel %vm41, %v464, -1e+30
    %v466 = vsel %vm42, %v465, -inf
    %467 = vmax.xlane.f32.xlu0 %v466
    %v468 = vpop.xlane.xlu0 %467
    %v469 = vsub.f32 %v465, %v468
    %v470 = vmul.f32 %v469, 1.442695
    %v471 = vpow.pop %v470
    %v472 = vsel %vm42, %v471, 0.0
    %473 = vadd.xlane.f32.xlu0 %v472
    %v474 = vpop.xlane.xlu0 %473
    %v475 = vadd.f32 %v474, 1e-16
    %v476 = vrcp.pop %v475
    %v477 = vmul.f32 %v49, %v476
    %v478 = vmul.f32 %v471, %v477
    %v479 = vpack.c.bf16 %v478, %v478
    %482 = vrot.lane.b32.xlu0 %v379, 96
    %v483 = vpop.permute.xlu0 %482
    %484 = vrot.lane.b32.xlu0 %v380, 96
    %v485 = vpop.permute.xlu0 %484
    %v489 = vsel %vm42, %v479, 0
    %491 = vmatprep.subr.bf16.mxu0 0
    %492 = vmatpush1.bf16.msra.mxu0 0
    %493 = vmatprep.subr.bf16.mxu0 0
    %494 = vmatpush1.bf16.msra.mxu0 0
    %495 = vmatprep.subr.bf16.mxu0 0
    %496 = vmatpush1.bf16.msra.mxu0 0
    %497 = vmatprep.subr.bf16.mxu0 0
    %498 = vmatpush1.bf16.msra.mxu0 0
    %499 = vmatprep.subr.bf16.mxu0 0
    %500 = vmatpush1.bf16.msra.mxu0 0
    %501 = vmatprep.subr.bf16.mxu0 0
    %502 = vmatpush1.bf16.msra.mxu0 0
    %503 = vmatprep.subr.bf16.mxu0 0
    %504 = vmatpush1.bf16.msra.mxu0 %v485
    %505 = vmatprep.subr.bf16.mxu0 0
    %506 = vmatpush1.bf16.msra.mxu0 %v483
    %507 = vmatprep.subr.bf16.mxu0 0
    %508 = vmatpush2.bf16.msra.mxu0 0
    %509 = vmatprep.subr.bf16.mxu0 0
    %510 = vmatpush2.bf16.msra.mxu0 0
    %511 = vmatprep.subr.bf16.mxu0 0
    %512 = vmatpush2.bf16.msra.mxu0 0
    %513 = vmatprep.subr.bf16.mxu0 0
    %514 = vmatpush2.bf16.msra.mxu0 0
    %515 = vmatprep.subr.bf16.mxu0 0
    %516 = vmatpush2.bf16.msra.mxu0 0
    %517 = vmatprep.subr.bf16.mxu0 0
    %518 = vmatpush2.bf16.msra.mxu0 0
    %519 = vmatprep.subr.bf16.mxu0 0
    %520 = vmatpush2.bf16.msra.mxu0 0
    %521 = vmatprep.subr.bf16.mxu0 0
    %522 = vmatpush2.bf16.msra.mxu0 0
    %523 = vmatprep.mubr.bf16.mxu0 0
    %524 = vmatmul.mubr.bf16.gmra.mxu0 %v489
    %v525 = vpop.f32.mrf.mxu0
    %v526 = vadd.f32 0.0, %v525
    %v527 = vpop.f32.mrf.mxu0
    %v528 = vpop.f32.mrf.mxu0
    %v529 = vpop.f32.mrf.mxu0
    %530 = vdwg.mxu0
    %v531 = vpack.c.bf16 %v526, %v526
    %532 = vxpose.xlu0.c.b16.start [1/8] %v479, 128
    %533 = vxpose.xlu0.c.b16.cont [2/8] 0, 128
    %534 = vxpose.xlu0.c.b16.cont [3/8] 0, 128
    %535 = vxpose.xlu0.c.b16.cont [4/8] 0, 128
    %536 = vxpose.xlu0.c.b16.cont [5/8] 0, 128
    %537 = vxpose.xlu0.c.b16.cont [6/8] 0, 128
    %538 = vxpose.xlu0.c.b16.cont [7/8] 0, 128
    %539 = vxpose.xlu0.c.b16.end [8/8] 0, 128
    %v540 = vpop.trf.xlu0
    %v541 = vpop.trf.xlu0
    %v542 = vpop.trf.xlu0
    %v543 = vpop.trf.xlu0
    %v544 = vpop.trf.xlu0
    %v545 = vpop.trf.xlu0
    %v546 = vpop.trf.xlu0
    %v547 = vpop.trf.xlu0
    %v549 = vsel %vm82, %v540, 0
    %v552 = vsel %vm82, %v541, 0
    %vm554 = vcmask 1043456
    %v556 = vsel %vm554, %v531, 0
    %558 = vmatprep.subr.bf16.mxu0 0
    %559 = vmatpush1.bf16.msra.mxu0 0
    %560 = vmatprep.subr.bf16.mxu0 0
    %561 = vmatpush1.bf16.msra.mxu0 0
    %562 = vmatprep.subr.bf16.mxu0 0
    %563 = vmatpush1.bf16.msra.mxu0 0
    %564 = vmatprep.subr.bf16.mxu0 0
    %565 = vmatpush1.bf16.msra.mxu0 0
    %566 = vmatprep.subr.bf16.mxu0 0
    %567 = vmatpush1.bf16.msra.mxu0 0
    %568 = vmatprep.subr.bf16.mxu0 0
    %569 = vmatpush1.bf16.msra.mxu0 0
    %570 = vmatprep.subr.bf16.mxu0 0
    %571 = vmatpush1.bf16.msra.mxu0 0
    %572 = vmatprep.subr.bf16.mxu0 0
    %573 = vmatpush1.bf16.msra.mxu0 %v556
    %574 = vmatprep.subr.bf16.mxu0 0
    %575 = vmatpush2.bf16.msra.mxu0 0
    %576 = vmatprep.subr.bf16.mxu0 0
    %577 = vmatpush2.bf16.msra.mxu0 0
    %578 = vmatprep.subr.bf16.mxu0 0
    %579 = vmatpush2.bf16.msra.mxu0 0
    %580 = vmatprep.subr.bf16.mxu0 0
    %581 = vmatpush2.bf16.msra.mxu0 0
    %582 = vmatprep.subr.bf16.mxu0 0
    %583 = vmatpush2.bf16.msra.mxu0 0
    %584 = vmatprep.subr.bf16.mxu0 0
    %585 = vmatpush2.bf16.msra.mxu0 0
    %586 = vmatprep.subr.bf16.mxu0 0
    %587 = vmatpush2.bf16.msra.mxu0 0
    %588 = vmatprep.subr.bf16.mxu0 0
    %589 = vmatpush2.bf16.msra.mxu0 0
    %590 = vmatprep.mubr.bf16.mxu0 0
    %591 = vmatmul.mubr.bf16.gmra.mxu0 %v549
    %v592 = vpop.f32.mrf.mxu0
    %v593 = vadd.f32 0.0, %v592
    %v594 = vpop.f32.mrf.mxu0
    %v595 = vpop.f32.mrf.mxu0
    %v596 = vadd.f32 0.0, %v595
    %v597 = vpop.f32.mrf.mxu0
    %598 = vmatprep.mubr.bf16.mxu0 0
    %599 = vmatmul.mubr.bf16.gmra.mxu0 %v552
    %v600 = vpop.f32.mrf.mxu0
    %v601 = vadd.f32 0.0, %v600
    %v602 = vpop.f32.mrf.mxu0
    %v603 = vpop.f32.mrf.mxu0
    %v604 = vadd.f32 0.0, %v603
    %v605 = vpop.f32.mrf.mxu0
    %606 = vdwg.mxu0
    %607 = vxpose.xlu0.c.b16.start [1/8] %v408, 128
    %608 = vxpose.xlu0.c.b16.cont [2/8] 0, 128
    %609 = vxpose.xlu0.c.b16.cont [3/8] 0, 128
    %610 = vxpose.xlu0.c.b16.cont [4/8] 0, 128
    %611 = vxpose.xlu0.c.b16.cont [5/8] 0, 128
    %612 = vxpose.xlu0.c.b16.cont [6/8] 0, 128
    %613 = vxpose.xlu0.c.b16.cont [7/8] 0, 128
    %614 = vxpose.xlu0.c.b16.end [8/8] 0, 128
    %v615 = vpop.trf.xlu0
    %v616 = vpop.trf.xlu0
    %v617 = vpop.trf.xlu0
    %v618 = vpop.trf.xlu0
    %v619 = vpop.trf.xlu0
    %v620 = vpop.trf.xlu0
    %v621 = vpop.trf.xlu0
    %v622 = vpop.trf.xlu0
    %v624 = vsel %vm82, %v615, 0
    %v627 = vsel %vm82, %v616, 0
    %v630 = vsel %vm554, %v452, 0
    %632 = vmatprep.subr.bf16.mxu0 0
    %633 = vmatpush1.bf16.msra.mxu0 0
    %634 = vmatprep.subr.bf16.mxu0 0
    %635 = vmatpush1.bf16.msra.mxu0 0
    %636 = vmatprep.subr.bf16.mxu0 0
    %637 = vmatpush1.bf16.msra.mxu0 0
    %638 = vmatprep.subr.bf16.mxu0 0
    %639 = vmatpush1.bf16.msra.mxu0 0
    %640 = vmatprep.subr.bf16.mxu0 0
    %641 = vmatpush1.bf16.msra.mxu0 0
    %642 = vmatprep.subr.bf16.mxu0 0
    %643 = vmatpush1.bf16.msra.mxu0 0
    %644 = vmatprep.subr.bf16.mxu0 0
    %645 = vmatpush1.bf16.msra.mxu0 0
    %646 = vmatprep.subr.bf16.mxu0 0
    %647 = vmatpush1.bf16.msra.mxu0 %v630
    %648 = vmatprep.subr.bf16.mxu0 0
    %649 = vmatpush2.bf16.msra.mxu0 0
    %650 = vmatprep.subr.bf16.mxu0 0
    %651 = vmatpush2.bf16.msra.mxu0 0
    %652 = vmatprep.subr.bf16.mxu0 0
    %653 = vmatpush2.bf16.msra.mxu0 0
    %654 = vmatprep.subr.bf16.mxu0 0
    %655 = vmatpush2.bf16.msra.mxu0 0
    %656 = vmatprep.subr.bf16.mxu0 0
    %657 = vmatpush2.bf16.msra.mxu0 0
    %658 = vmatprep.subr.bf16.mxu0 0
    %659 = vmatpush2.bf16.msra.mxu0 0
    %660 = vmatprep.subr.bf16.mxu0 0
    %661 = vmatpush2.bf16.msra.mxu0 0
    %662 = vmatprep.subr.bf16.mxu0 0
    %663 = vmatpush2.bf16.msra.mxu0 0
    %664 = vmatprep.mubr.bf16.mxu0 0
    %665 = vmatmul.mubr.bf16.gmra.mxu0 %v624
    %v666 = vpop.f32.mrf.mxu0
    %v667 = vadd.f32 %v593, %v666
    %v668 = vpop.f32.mrf.mxu0
    %v669 = vpop.f32.mrf.mxu0
    %v670 = vadd.f32 %v596, %v669
    %v671 = vpop.f32.mrf.mxu0
    %672 = vmatprep.mubr.bf16.mxu0 0
    %673 = vmatmul.mubr.bf16.gmra.mxu0 %v627
    %v674 = vpop.f32.mrf.mxu0
    %v675 = vadd.f32 %v601, %v674
    %v676 = vpop.f32.mrf.mxu0
    %v677 = vpop.f32.mrf.mxu0
    %v678 = vadd.f32 %v604, %v677
    %v679 = vpop.f32.mrf.mxu0
    %680 = vdwg.mxu0
    %681 = vset.pattern.permute.xlu0 2
    %682 = vperm.xlu0 %681, %v374
    %v683 = vpop.permute.xlu0 %682
    %v685 = vlaneseq
    %v686 = vshrl.u32 %v685, 7
    %v687 = vsub.s32 2, %v686
    %v688 = vrot.slane %v325, %v687
    %v689 = vadd.f32 %v683, %v688
    %vm690 = vcmp.gt.f32.partialorder %v689, 0.0
    %v691 = vmul.f32 %v689, 0.2
    %v692 = vsel %vm690, %v689, %v691
    %v693 = vsel %vm41, %v692, -1e+30
    %v694 = vsel %vm42, %v693, -inf
    %695 = vmax.xlane.f32.xlu0 %v694
    %v696 = vpop.xlane.xlu0 %695
    %v697 = vsub.f32 %v693, %v696
    %v698 = vmul.f32 %v697, 1.442695
    %v699 = vpow.pop %v698
    %v700 = vsel %vm42, %v699, 0.0
    %701 = vadd.xlane.f32.xlu0 %v700
    %v702 = vpop.xlane.xlu0 %701
    %v703 = vadd.f32 %v702, 1e-16
    %v704 = vrcp.pop %v703
    %v705 = vmul.f32 %v49, %v704
    %v706 = vmul.f32 %v699, %v705
    %v707 = vpack.c.bf16 %v706, %v706
    %708 = vrot.lane.b32.xlu0 %v379, 64
    %v709 = vpop.permute.xlu0 %708
    %710 = vrot.lane.b32.xlu0 %v380, 64
    %v711 = vpop.permute.xlu0 %710
    %v715 = vsel %vm42, %v707, 0
    %717 = vmatprep.subr.bf16.mxu0 0
    %718 = vmatpush1.bf16.msra.mxu0 0
    %719 = vmatprep.subr.bf16.mxu0 0
    %720 = vmatpush1.bf16.msra.mxu0 0
    %721 = vmatprep.subr.bf16.mxu0 0
    %722 = vmatpush1.bf16.msra.mxu0 0
    %723 = vmatprep.subr.bf16.mxu0 0
    %724 = vmatpush1.bf16.msra.mxu0 0
    %725 = vmatprep.subr.bf16.mxu0 0
    %726 = vmatpush1.bf16.msra.mxu0 0
    %727 = vmatprep.subr.bf16.mxu0 0
    %728 = vmatpush1.bf16.msra.mxu0 0
    %729 = vmatprep.subr.bf16.mxu0 0
    %730 = vmatpush1.bf16.msra.mxu0 %v711
    %731 = vmatprep.subr.bf16.mxu0 0
    %732 = vmatpush1.bf16.msra.mxu0 %v709
    %733 = vmatprep.subr.bf16.mxu0 0
    %734 = vmatpush2.bf16.msra.mxu0 0
    %735 = vmatprep.subr.bf16.mxu0 0
    %736 = vmatpush2.bf16.msra.mxu0 0
    %737 = vmatprep.subr.bf16.mxu0 0
    %738 = vmatpush2.bf16.msra.mxu0 0
    %739 = vmatprep.subr.bf16.mxu0 0
    %740 = vmatpush2.bf16.msra.mxu0 0
    %741 = vmatprep.subr.bf16.mxu0 0
    %742 = vmatpush2.bf16.msra.mxu0 0
    %743 = vmatprep.subr.bf16.mxu0 0
    %744 = vmatpush2.bf16.msra.mxu0 0
    %745 = vmatprep.subr.bf16.mxu0 0
    %746 = vmatpush2.bf16.msra.mxu0 0
    %747 = vmatprep.subr.bf16.mxu0 0
    %748 = vmatpush2.bf16.msra.mxu0 0
    %749 = vmatprep.mubr.bf16.mxu0 0
    %750 = vmatmul.mubr.bf16.gmra.mxu0 %v715
    %v751 = vpop.f32.mrf.mxu0
    %v752 = vadd.f32 0.0, %v751
    %v753 = vpop.f32.mrf.mxu0
    %v754 = vpop.f32.mrf.mxu0
    %v755 = vpop.f32.mrf.mxu0
    %756 = vdwg.mxu0
    %v757 = vpack.c.bf16 %v752, %v752
    %758 = vxpose.xlu0.c.b16.start [1/8] %v707, 128
    %759 = vxpose.xlu0.c.b16.cont [2/8] 0, 128
    %760 = vxpose.xlu0.c.b16.cont [3/8] 0, 128
    %761 = vxpose.xlu0.c.b16.cont [4/8] 0, 128
    %762 = vxpose.xlu0.c.b16.cont [5/8] 0, 128
    %763 = vxpose.xlu0.c.b16.cont [6/8] 0, 128
    %764 = vxpose.xlu0.c.b16.cont [7/8] 0, 128
    %765 = vxpose.xlu0.c.b16.end [8/8] 0, 128
    %v766 = vpop.trf.xlu0
    %v767 = vpop.trf.xlu0
    %v768 = vpop.trf.xlu0
    %v769 = vpop.trf.xlu0
    %v770 = vpop.trf.xlu0
    %v771 = vpop.trf.xlu0
    %v772 = vpop.trf.xlu0
    %v773 = vpop.trf.xlu0
    %v775 = vsel %vm82, %v766, 0
    %v778 = vsel %vm82, %v767, 0
    %v781 = vsel %vm554, %v757, 0
    %783 = vmatprep.subr.bf16.mxu0 0
    %784 = vmatpush1.bf16.msra.mxu0 0
    %785 = vmatprep.subr.bf16.mxu0 0
    %786 = vmatpush1.bf16.msra.mxu0 0
    %787 = vmatprep.subr.bf16.mxu0 0
    %788 = vmatpush1.bf16.msra.mxu0 0
    %789 = vmatprep.subr.bf16.mxu0 0
    %790 = vmatpush1.bf16.msra.mxu0 0
    %791 = vmatprep.subr.bf16.mxu0 0
    %792 = vmatpush1.bf16.msra.mxu0 0
    %793 = vmatprep.subr.bf16.mxu0 0
    %794 = vmatpush1.bf16.msra.mxu0 0
    %795 = vmatprep.subr.bf16.mxu0 0
    %796 = vmatpush1.bf16.msra.mxu0 0
    %797 = vmatprep.subr.bf16.mxu0 0
    %798 = vmatpush1.bf16.msra.mxu0 %v781
    %799 = vmatprep.subr.bf16.mxu0 0
    %800 = vmatpush2.bf16.msra.mxu0 0
    %801 = vmatprep.subr.bf16.mxu0 0
    %802 = vmatpush2.bf16.msra.mxu0 0
    %803 = vmatprep.subr.bf16.mxu0 0
    %804 = vmatpush2.bf16.msra.mxu0 0
    %805 = vmatprep.subr.bf16.mxu0 0
    %806 = vmatpush2.bf16.msra.mxu0 0
    %807 = vmatprep.subr.bf16.mxu0 0
    %808 = vmatpush2.bf16.msra.mxu0 0
    %809 = vmatprep.subr.bf16.mxu0 0
    %810 = vmatpush2.bf16.msra.mxu0 0
    %811 = vmatprep.subr.bf16.mxu0 0
    %812 = vmatpush2.bf16.msra.mxu0 0
    %813 = vmatprep.subr.bf16.mxu0 0
    %814 = vmatpush2.bf16.msra.mxu0 0
    %815 = vmatprep.mubr.bf16.mxu0 0
    %816 = vmatmul.mubr.bf16.gmra.mxu0 %v775
    %v817 = vpop.f32.mrf.mxu0
    %v818 = vadd.f32 0.0, %v817
    %v819 = vpop.f32.mrf.mxu0
    %v820 = vpop.f32.mrf.mxu0
    %v821 = vadd.f32 0.0, %v820
    %v822 = vpop.f32.mrf.mxu0
    %823 = vmatprep.mubr.bf16.mxu0 0
    %824 = vmatmul.mubr.bf16.gmra.mxu0 %v778
    %v825 = vpop.f32.mrf.mxu0
    %v826 = vadd.f32 0.0, %v825
    %v827 = vpop.f32.mrf.mxu0
    %v828 = vpop.f32.mrf.mxu0
    %v829 = vadd.f32 0.0, %v828
    %v830 = vpop.f32.mrf.mxu0
    %831 = vdwg.mxu0
    %v832 = vadd.f32 %v667, %v818
    %v833 = vadd.f32 %v670, %v821
    %v834 = vadd.f32 %v675, %v826
    %v835 = vadd.f32 %v678, %v829
    %836 = vset.pattern.permute.xlu0 3
    %837 = vperm.xlu0 %836, %v374
    %v838 = vpop.permute.xlu0 %837
    %v840 = vlaneseq
    %v841 = vshrl.u32 %v840, 7
    %v842 = vsub.s32 3, %v841
    %v843 = vrot.slane %v325, %v842
    %v844 = vadd.f32 %v838, %v843
    %vm845 = vcmp.gt.f32.partialorder %v844, 0.0
    %v846 = vmul.f32 %v844, 0.2
    %v847 = vsel %vm845, %v844, %v846
    %v848 = vsel %vm41, %v847, -1e+30
    %v849 = vsel %vm42, %v848, -inf
    %850 = vmax.xlane.f32.xlu0 %v849
    %v851 = vpop.xlane.xlu0 %850
    %v852 = vsub.f32 %v848, %v851
    %v853 = vmul.f32 %v852, 1.442695
    %v854 = vpow.pop %v853
    %v855 = vsel %vm42, %v854, 0.0
    %856 = vadd.xlane.f32.xlu0 %v855
    %v857 = vpop.xlane.xlu0 %856
    %v858 = vadd.f32 %v857, 1e-16
    %v859 = vrcp.pop %v858
    %v860 = vmul.f32 %v49, %v859
    %v861 = vmul.f32 %v854, %v860
    %v862 = vpack.c.bf16 %v861, %v861
    %863 = vrot.lane.b32.xlu0 %v379, 32
    %v864 = vpop.permute.xlu0 %863
    %865 = vrot.lane.b32.xlu0 %v380, 32
    %v866 = vpop.permute.xlu0 %865
    %v870 = vsel %vm42, %v862, 0
    %872 = vmatprep.subr.bf16.mxu0 0
    %873 = vmatpush1.bf16.msra.mxu0 0
    %874 = vmatprep.subr.bf16.mxu0 0
    %875 = vmatpush1.bf16.msra.mxu0 0
    %876 = vmatprep.subr.bf16.mxu0 0
    %877 = vmatpush1.bf16.msra.mxu0 0
    %878 = vmatprep.subr.bf16.mxu0 0
    %879 = vmatpush1.bf16.msra.mxu0 0
    %880 = vmatprep.subr.bf16.mxu0 0
    %881 = vmatpush1.bf16.msra.mxu0 0
    %882 = vmatprep.subr.bf16.mxu0 0
    %883 = vmatpush1.bf16.msra.mxu0 0
    %884 = vmatprep.subr.bf16.mxu0 0
    %885 = vmatpush1.bf16.msra.mxu0 %v866
    %886 = vmatprep.subr.bf16.mxu0 0
    %887 = vmatpush1.bf16.msra.mxu0 %v864
    %888 = vmatprep.subr.bf16.mxu0 0
    %889 = vmatpush2.bf16.msra.mxu0 0
    %890 = vmatprep.subr.bf16.mxu0 0
    %891 = vmatpush2.bf16.msra.mxu0 0
    %892 = vmatprep.subr.bf16.mxu0 0
    %893 = vmatpush2.bf16.msra.mxu0 0
    %894 = vmatprep.subr.bf16.mxu0 0
    %895 = vmatpush2.bf16.msra.mxu0 0
    %896 = vmatprep.subr.bf16.mxu0 0
    %897 = vmatpush2.bf16.msra.mxu0 0
    %898 = vmatprep.subr.bf16.mxu0 0
    %899 = vmatpush2.bf16.msra.mxu0 0
    %900 = vmatprep.subr.bf16.mxu0 0
    %901 = vmatpush2.bf16.msra.mxu0 0
    %902 = vmatprep.subr.bf16.mxu0 0
    %903 = vmatpush2.bf16.msra.mxu0 0
    %904 = vmatprep.mubr.bf16.mxu0 0
    %905 = vmatmul.mubr.bf16.gmra.mxu0 %v870
    %v906 = vpop.f32.mrf.mxu0
    %v907 = vadd.f32 0.0, %v906
    %v908 = vpop.f32.mrf.mxu0
    %v909 = vpop.f32.mrf.mxu0
    %v910 = vpop.f32.mrf.mxu0
    %911 = vdwg.mxu0
    %v912 = vpack.c.bf16 %v907, %v907
    %913 = vxpose.xlu0.c.b16.start [1/8] %v862, 128
    %914 = vxpose.xlu0.c.b16.cont [2/8] 0, 128
    %915 = vxpose.xlu0.c.b16.cont [3/8] 0, 128
    %916 = vxpose.xlu0.c.b16.cont [4/8] 0, 128
    %917 = vxpose.xlu0.c.b16.cont [5/8] 0, 128
    %918 = vxpose.xlu0.c.b16.cont [6/8] 0, 128
    %919 = vxpose.xlu0.c.b16.cont [7/8] 0, 128
    %920 = vxpose.xlu0.c.b16.end [8/8] 0, 128
    %v921 = vpop.trf.xlu0
    %v922 = vpop.trf.xlu0
    %v923 = vpop.trf.xlu0
    %v924 = vpop.trf.xlu0
    %v925 = vpop.trf.xlu0
    %v926 = vpop.trf.xlu0
    %v927 = vpop.trf.xlu0
    %v928 = vpop.trf.xlu0
    %v930 = vsel %vm82, %v921, 0
    %v933 = vsel %vm82, %v922, 0
    %v936 = vsel %vm554, %v912, 0
    %938 = vmatprep.subr.bf16.mxu0 0
    %939 = vmatpush1.bf16.msra.mxu0 0
    %940 = vmatprep.subr.bf16.mxu0 0
    %941 = vmatpush1.bf16.msra.mxu0 0
    %942 = vmatprep.subr.bf16.mxu0 0
    %943 = vmatpush1.bf16.msra.mxu0 0
    %944 = vmatprep.subr.bf16.mxu0 0
    %945 = vmatpush1.bf16.msra.mxu0 0
    %946 = vmatprep.subr.bf16.mxu0 0
    %947 = vmatpush1.bf16.msra.mxu0 0
    %948 = vmatprep.subr.bf16.mxu0 0
    %949 = vmatpush1.bf16.msra.mxu0 0
    %950 = vmatprep.subr.bf16.mxu0 0
    %951 = vmatpush1.bf16.msra.mxu0 0
    %952 = vmatprep.subr.bf16.mxu0 0
    %953 = vmatpush1.bf16.msra.mxu0 %v936
    %954 = vmatprep.subr.bf16.mxu0 0
    %955 = vmatpush2.bf16.msra.mxu0 0
    %956 = vmatprep.subr.bf16.mxu0 0
    %957 = vmatpush2.bf16.msra.mxu0 0
    %958 = vmatprep.subr.bf16.mxu0 0
    %959 = vmatpush2.bf16.msra.mxu0 0
    %960 = vmatprep.subr.bf16.mxu0 0
    %961 = vmatpush2.bf16.msra.mxu0 0
    %962 = vmatprep.subr.bf16.mxu0 0
    %963 = vmatpush2.bf16.msra.mxu0 0
    %964 = vmatprep.subr.bf16.mxu0 0
    %965 = vmatpush2.bf16.msra.mxu0 0
    %966 = vmatprep.subr.bf16.mxu0 0
    %967 = vmatpush2.bf16.msra.mxu0 0
    %968 = vmatprep.subr.bf16.mxu0 0
    %969 = vmatpush2.bf16.msra.mxu0 0
    %970 = vmatprep.mubr.bf16.mxu0 0
    %971 = vmatmul.mubr.bf16.gmra.mxu0 %v930
    %v972 = vpop.f32.mrf.mxu0
    %v973 = vadd.f32 0.0, %v972
    %v974 = vpop.f32.mrf.mxu0
    %v975 = vpop.f32.mrf.mxu0
    %v976 = vadd.f32 0.0, %v975
    %v977 = vpop.f32.mrf.mxu0
    %978 = vmatprep.mubr.bf16.mxu0 0
    %979 = vmatmul.mubr.bf16.gmra.mxu0 %v933
    %v980 = vpop.f32.mrf.mxu0
    %v981 = vadd.f32 0.0, %v980
    %v982 = vpop.f32.mrf.mxu0
    %v983 = vpop.f32.mrf.mxu0
    %v984 = vadd.f32 0.0, %v983
    %v985 = vpop.f32.mrf.mxu0
    %986 = vdwg.mxu0
    %v987 = vadd.f32 %v832, %v973
    %v988 = vadd.f32 %v833, %v976
    %v989 = vadd.f32 %v834, %v981
    %v990 = vadd.f32 %v835, %v984
    %v991 = vmul.f32 %v192, 0.25
    %v992 = vmul.f32 %v193, 0.25
    %v993 = vmul.f32 %v194, 0.25
    %v994 = vmul.f32 %v195, 0.25
    %996 = vset.pattern.permute.xlu0 0
    %997 = vperm.xlu0 %996, %v991
    %v998 = vpop.permute.xlu0 %997
    %1001 = vset.pattern.permute.xlu0 0
    %1002 = vperm.xlu0 %1001, %v992
    %v1003 = vpop.permute.xlu0 %1002
    %1006 = vset.pattern.permute.xlu0 0
    %1007 = vperm.xlu0 %1006, %v993
    %v1008 = vpop.permute.xlu0 %1007
    %1011 = vset.pattern.permute.xlu0 0
    %1012 = vperm.xlu0 %1011, %v994
    %v1013 = vpop.permute.xlu0 %1012
    %v1015 = vmul.f32 %v987, %v998
    %v1016 = vmul.f32 %v988, %v1003
    %v1017 = vmul.f32 %v989, %v1008
    %v1018 = vmul.f32 %v990, %v1013
    %v1019 = vld [vmem:[%s6] sm:$0x1]
    %v1021 = vlaneseq
    %v1022 = vshrl.u32 %v1021, 7
    %v1023 = vsub.s32 0, %v1022
    %v1024 = vrot.slane %v1019, %v1023
    %v1026 = vadd.f32 %v1015, %v1024
    %v1027 = vadd.f32 %v1016, %v1024
    %v1028 = vadd.f32 %v1017, %v1024
    %v1029 = vadd.f32 %v1018, %v1024
    %vm1030 = vcmp.gt.f32.partialorder %v1026, 0.0
    %vm1031 = vcmp.gt.f32.partialorder %v1027, 0.0
    %vm1032 = vcmp.gt.f32.partialorder %v1028, 0.0
    %vm1033 = vcmp.gt.f32.partialorder %v1029, 0.0
    %v1034 = vmul.f32 %v1026, 0.2
    %v1035 = vmul.f32 %v1027, 0.2
    %v1036 = vmul.f32 %v1028, 0.2
    %v1037 = vmul.f32 %v1029, 0.2
    %v1038 = vsel %vm1030, %v1026, %v1034
    %v1039 = vsel %vm1031, %v1027, %v1035
    %v1040 = vsel %vm1032, %v1028, %v1036
    %v1041 = vsel %vm1033, %v1029, %v1037
    %v1042 = vpack.c.bf16 %v1039, %v1038
    %v1043 = vpack.c.bf16 %v1041, %v1040
    %v1044 = vld [vmem:[%s7] sm:$0xff]
    %v1045 = vld [vmem:[%s7 + $0x8] sm:$0xff]
    %v1046 = vld [vmem:[%s7 + $0x10] sm:$0xff]
    %v1047 = vld [vmem:[%s7 + $0x18] sm:$0xff]
    %v1048 = vpack.c.bf16 %v1045, %v1044
    %v1049 = vpack.c.bf16 %v1047, %v1046
    %v1051 = vsel %vm42, %v1042, 0
    %v1054 = vsel %vm42, %v1043, 0
    %1056 = vmatprep.subr.bf16.mxu0 0
    %1057 = vmatpush1.bf16.msra.mxu0 0
    %1058 = vmatprep.subr.bf16.mxu0 0
    %1059 = vmatpush1.bf16.msra.mxu0 0
    %1060 = vmatprep.subr.bf16.mxu0 0
    %1061 = vmatpush1.bf16.msra.mxu0 0
    %1062 = vmatprep.subr.bf16.mxu0 0
    %1063 = vmatpush1.bf16.msra.mxu0 0
    %1064 = vmatprep.subr.bf16.mxu0 0
    %1065 = vmatpush1.bf16.msra.mxu0 0
    %1066 = vmatprep.subr.bf16.mxu0 0
    %1067 = vmatpush1.bf16.msra.mxu0 0
    %1068 = vmatprep.subr.bf16.mxu0 0
    %1069 = vmatpush1.bf16.msra.mxu0 %v1049
    %1070 = vmatprep.subr.bf16.mxu0 0
    %1071 = vmatpush1.bf16.msra.mxu0 %v1048
    %1072 = vmatprep.subr.bf16.mxu0 0
    %1073 = vmatpush2.bf16.msra.mxu0 0
    %1074 = vmatprep.subr.bf16.mxu0 0
    %1075 = vmatpush2.bf16.msra.mxu0 0
    %1076 = vmatprep.subr.bf16.mxu0 0
    %1077 = vmatpush2.bf16.msra.mxu0 0
    %1078 = vmatprep.subr.bf16.mxu0 0
    %1079 = vmatpush2.bf16.msra.mxu0 0
    %1080 = vmatprep.subr.bf16.mxu0 0
    %1081 = vmatpush2.bf16.msra.mxu0 0
    %1082 = vmatprep.subr.bf16.mxu0 0
    %1083 = vmatpush2.bf16.msra.mxu0 0
    %1084 = vmatprep.subr.bf16.mxu0 0
    %1085 = vmatpush2.bf16.msra.mxu0 0
    %1086 = vmatprep.subr.bf16.mxu0 0
    %1087 = vmatpush2.bf16.msra.mxu0 0
    %1088 = vmatprep.mubr.bf16.mxu0 0
    %1089 = vmatmul.mubr.bf16.gmra.mxu0 %v1051
    %v1090 = vpop.f32.mrf.mxu0
    %v1091 = vadd.f32 0.0, %v1090
    %v1092 = vpop.f32.mrf.mxu0
    %v1093 = vpop.f32.mrf.mxu0
    %v1094 = vadd.f32 0.0, %v1093
    %v1095 = vpop.f32.mrf.mxu0
    %1096 = vmatprep.mubr.bf16.mxu0 0
    %1097 = vmatmul.mubr.bf16.gmra.mxu0 %v1054
    %v1098 = vpop.f32.mrf.mxu0
    %v1099 = vadd.f32 0.0, %v1098
    %v1100 = vpop.f32.mrf.mxu0
    %v1101 = vpop.f32.mrf.mxu0
    %v1102 = vadd.f32 0.0, %v1101
    %v1103 = vpop.f32.mrf.mxu0
    %1104 = vdwg.mxu0
    %v1105 = vld [vmem:[%s8] sm:$0xff]
    %v1106 = vld [vmem:[%s8 + $0x8] sm:$0xff]
    %v1107 = vld [vmem:[%s8 + $0x10] sm:$0xff]
    %v1108 = vld [vmem:[%s8 + $0x18] sm:$0xff]
    %v1109 = vpack.c.bf16 %v1106, %v1105
    %v1110 = vpack.c.bf16 %v1108, %v1107
    %1111 = vxpose.xlu0.c.b16.start [1/8] %v1109, 128
    %1112 = vxpose.xlu0.c.b16.cont [2/8] %v1110, 128
    %1113 = vxpose.xlu0.c.b16.cont [3/8] 0, 128
    %1114 = vxpose.xlu0.c.b16.cont [4/8] 0, 128
    %1115 = vxpose.xlu0.c.b16.cont [5/8] 0, 128
    %1116 = vxpose.xlu0.c.b16.cont [6/8] 0, 128
    %1117 = vxpose.xlu0.c.b16.cont [7/8] 0, 128
    %1118 = vxpose.xlu0.c.b16.end [8/8] 0, 128
    %v1119 = vpop.trf.xlu0
    %v1120 = vpop.trf.xlu0
    %v1121 = vpop.trf.xlu0
    %v1122 = vpop.trf.xlu0
    %v1123 = vpop.trf.xlu0
    %v1124 = vpop.trf.xlu0
    %v1125 = vpop.trf.xlu0
    %v1126 = vpop.trf.xlu0
    %v1128 = vsel %vm42, %v1119, 0
    %1130 = vmatprep.subr.bf16.mxu0 0
    %1131 = vmatpush1.bf16.xpose.msra.mxu0 0
    %1132 = vmatprep.subr.bf16.mxu0 0
    %1133 = vmatpush1.bf16.xpose.msra.mxu0 0
    %1134 = vmatprep.subr.bf16.mxu0 0
    %1135 = vmatpush1.bf16.xpose.msra.mxu0 0
    %1136 = vmatprep.subr.bf16.mxu0 0
    %1137 = vmatpush1.bf16.xpose.msra.mxu0 0
    %1138 = vmatprep.subr.bf16.mxu0 0
    %1139 = vmatpush1.bf16.xpose.msra.mxu0 0
    %1140 = vmatprep.subr.bf16.mxu0 0
    %1141 = vmatpush1.bf16.xpose.msra.mxu0 0
    %1142 = vmatprep.subr.bf16.mxu0 0
    %1143 = vmatpush1.bf16.xpose.msra.mxu0 %v1054
    %1144 = vmatprep.subr.bf16.mxu0 0
    %1145 = vmatpush1.bf16.xpose.msra.mxu0 %v1051
    %1146 = vmatprep.subr.bf16.mxu0 0
    %1147 = vmatpush2.bf16.xpose.msra.mxu0 0
    %1148 = vmatprep.subr.bf16.mxu0 0
    %1149 = vmatpush2.bf16.xpose.msra.mxu0 0
    %1150 = vmatprep.subr.bf16.mxu0 0
    %1151 = vmatpush2.bf16.xpose.msra.mxu0 0
    %1152 = vmatprep.subr.bf16.mxu0 0
    %1153 = vmatpush2.bf16.xpose.msra.mxu0 0
    %1154 = vmatprep.subr.bf16.mxu0 0
    %1155 = vmatpush2.bf16.xpose.msra.mxu0 0
    %1156 = vmatprep.subr.bf16.mxu0 0
    %1157 = vmatpush2.bf16.xpose.msra.mxu0 0
    %1158 = vmatprep.subr.bf16.mxu0 0
    %1159 = vmatpush2.bf16.xpose.msra.mxu0 0
    %1160 = vmatprep.subr.bf16.mxu0 0
    %1161 = vmatpush2.bf16.xpose.msra.mxu0 0
    %1162 = vmatprep.mubr.bf16.mxu0 0
    %1163 = vmatmul.mubr.bf16.gmra.mxu0 %v1128
    %v1164 = vpop.f32.mrf.mxu0
    %v1165 = vadd.f32 0.0, %v1164
    %v1166 = vpop.f32.mrf.mxu0
    %v1167 = vpop.f32.mrf.mxu0
    %v1168 = vpop.f32.mrf.mxu0
    %1169 = vdwg.mxu0
    %v1170 = vld [vmem:[%s9] sm:$0xff]
    %v1171 = vld [vmem:[%s9 + $0x8] sm:$0xff]
    %v1172 = vld [vmem:[%s9 + $0x10] sm:$0xff]
    %v1173 = vld [vmem:[%s9 + $0x18] sm:$0xff]
    %v1174 = vpack.c.bf16 %v1171, %v1170
    %v1175 = vpack.c.bf16 %v1173, %v1172
    %1176 = vmatprep.subr.bf16.mxu0 0
    %1177 = vmatpush1.bf16.msra.mxu0 0
    %1178 = vmatprep.subr.bf16.mxu0 0
    %1179 = vmatpush1.bf16.msra.mxu0 0
    %1180 = vmatprep.subr.bf16.mxu0 0
    %1181 = vmatpush1.bf16.msra.mxu0 0
    %1182 = vmatprep.subr.bf16.mxu0 0
    %1183 = vmatpush1.bf16.msra.mxu0 0
    %1184 = vmatprep.subr.bf16.mxu0 0
    %1185 = vmatpush1.bf16.msra.mxu0 0
    %1186 = vmatprep.subr.bf16.mxu0 0
    %1187 = vmatpush1.bf16.msra.mxu0 0
    %1188 = vmatprep.subr.bf16.mxu0 0
    %1189 = vmatpush1.bf16.msra.mxu0 %v1175
    %1190 = vmatprep.subr.bf16.mxu0 0
    %1191 = vmatpush1.bf16.msra.mxu0 %v1174
    %1192 = vmatprep.subr.bf16.mxu0 0
    %1193 = vmatpush2.bf16.msra.mxu0 0
    %1194 = vmatprep.subr.bf16.mxu0 0
    %1195 = vmatpush2.bf16.msra.mxu0 0
    %1196 = vmatprep.subr.bf16.mxu0 0
    %1197 = vmatpush2.bf16.msra.mxu0 0
    %1198 = vmatprep.subr.bf16.mxu0 0
    %1199 = vmatpush2.bf16.msra.mxu0 0
    %1200 = vmatprep.subr.bf16.mxu0 0
    %1201 = vmatpush2.bf16.msra.mxu0 0
    %1202 = vmatprep.subr.bf16.mxu0 0
    %1203 = vmatpush2.bf16.msra.mxu0 0
    %1204 = vmatprep.subr.bf16.mxu0 0
    %1205 = vmatpush2.bf16.msra.mxu0 0
    %1206 = vmatprep.subr.bf16.mxu0 0
    %1207 = vmatpush2.bf16.msra.mxu0 0
    %1208 = vmatprep.mubr.bf16.mxu0 0
    %1209 = vmatmul.mubr.bf16.gmra.mxu0 %v337
    %v1210 = vpop.f32.mrf.mxu0
    %v1211 = vadd.f32 0.0, %v1210
    %v1212 = vpop.f32.mrf.mxu0
    %v1213 = vpop.f32.mrf.mxu0
    %v1214 = vpop.f32.mrf.mxu0
    %1215 = vdwg.mxu0
    %v1216 = vpack.c.bf16 %v1094, %v1091
    %v1217 = vpack.c.bf16 %v1102, %v1099
    %1219 = vset.pattern.permute.xlu0 0
    %1220 = vperm.xlu0 %1219, %v1211
    %v1221 = vpop.permute.xlu0 %1220
    %v1223 = vlaneseq
    %v1224 = vshrl.u32 %v1223, 7
    %v1225 = vsub.s32 0, %v1224
    %v1226 = vrot.slane %v1165, %v1225
    %v1227 = vadd.f32 %v1221, %v1226
    %vm1228 = vcmp.gt.f32.partialorder %v1227, 0.0
    %v1229 = vmul.f32 %v1227, 0.2
    %v1230 = vsel %vm1228, %v1227, %v1229
    %v1231 = vsel %vm41, %v1230, -1e+30
    %v1232 = vsel %vm42, %v1231, -inf
    %1233 = vmax.xlane.f32.xlu0 %v1232
    %v1234 = vpop.xlane.xlu0 %1233
    %v1235 = vsub.f32 %v1231, %v1234
    %v1236 = vmul.f32 %v1235, 1.442695
    %v1237 = vpow.pop %v1236
    %v1238 = vsel %vm42, %v1237, 0.0
    %1239 = vadd.xlane.f32.xlu0 %v1238
    %v1240 = vpop.xlane.xlu0 %1239
    %v1241 = vadd.f32 %v1240, 1e-16
    %v1242 = vrcp.pop %v1241
    %v1243 = vmul.f32 %v49, %v1242
    %v1244 = vmul.f32 %v1237, %v1243
    %v1245 = vpack.c.bf16 %v1244, %v1244
    %v1247 = vsel %vm42, %v1245, 0
    %1249 = vmatprep.subr.bf16.mxu0 0
    %1250 = vmatpush1.bf16.msra.mxu0 0
    %1251 = vmatprep.subr.bf16.mxu0 0
    %1252 = vmatpush1.bf16.msra.mxu0 0
    %1253 = vmatprep.subr.bf16.mxu0 0
    %1254 = vmatpush1.bf16.msra.mxu0 0
    %1255 = vmatprep.subr.bf16.mxu0 0
    %1256 = vmatpush1.bf16.msra.mxu0 0
    %1257 = vmatprep.subr.bf16.mxu0 0
    %1258 = vmatpush1.bf16.msra.mxu0 0
    %1259 = vmatprep.subr.bf16.mxu0 0
    %1260 = vmatpush1.bf16.msra.mxu0 0
    %1261 = vmatprep.subr.bf16.mxu0 0
    %1262 = vmatpush1.bf16.msra.mxu0 %v1217
    %1263 = vmatprep.subr.bf16.mxu0 0
    %1264 = vmatpush1.bf16.msra.mxu0 %v1216
    %1265 = vmatprep.subr.bf16.mxu0 0
    %1266 = vmatpush2.bf16.msra.mxu0 0
    %1267 = vmatprep.subr.bf16.mxu0 0
    %1268 = vmatpush2.bf16.msra.mxu0 0
    %1269 = vmatprep.subr.bf16.mxu0 0
    %1270 = vmatpush2.bf16.msra.mxu0 0
    %1271 = vmatprep.subr.bf16.mxu0 0
    %1272 = vmatpush2.bf16.msra.mxu0 0
    %1273 = vmatprep.subr.bf16.mxu0 0
    %1274 = vmatpush2.bf16.msra.mxu0 0
    %1275 = vmatprep.subr.bf16.mxu0 0
    %1276 = vmatpush2.bf16.msra.mxu0 0
    %1277 = vmatprep.subr.bf16.mxu0 0
    %1278 = vmatpush2.bf16.msra.mxu0 0
    %1279 = vmatprep.subr.bf16.mxu0 0
    %1280 = vmatpush2.bf16.msra.mxu0 0
    %1281 = vmatprep.mubr.bf16.mxu0 0
    %1282 = vmatmul.mubr.bf16.gmra.mxu0 %v1247
    %v1283 = vpop.f32.mrf.mxu0
    %v1284 = vadd.f32 0.0, %v1283
    %v1285 = vpop.f32.mrf.mxu0
    %v1286 = vpop.f32.mrf.mxu0
    %v1287 = vpop.f32.mrf.mxu0
    %1288 = vdwg.mxu0
    %v1289 = vpack.c.bf16 %v1284, %v1284
    %1290 = vxpose.xlu0.c.b16.start [1/8] %v1245, 128
    %1291 = vxpose.xlu0.c.b16.cont [2/8] 0, 128
    %1292 = vxpose.xlu0.c.b16.cont [3/8] 0, 128
    %1293 = vxpose.xlu0.c.b16.cont [4/8] 0, 128
    %1294 = vxpose.xlu0.c.b16.cont [5/8] 0, 128
    %1295 = vxpose.xlu0.c.b16.cont [6/8] 0, 128
    %1296 = vxpose.xlu0.c.b16.cont [7/8] 0, 128
    %1297 = vxpose.xlu0.c.b16.end [8/8] 0, 128
    %v1298 = vpop.trf.xlu0
    %v1299 = vpop.trf.xlu0
    %v1300 = vpop.trf.xlu0
    %v1301 = vpop.trf.xlu0
    %v1302 = vpop.trf.xlu0
    %v1303 = vpop.trf.xlu0
    %v1304 = vpop.trf.xlu0
    %v1305 = vpop.trf.xlu0
    %v1307 = vsel %vm82, %v1298, 0
    %v1310 = vsel %vm82, %v1299, 0
    %v1313 = vsel %vm554, %v1289, 0
    %1315 = vmatprep.subr.bf16.mxu0 0
    %1316 = vmatpush1.bf16.msra.mxu0 0
    %1317 = vmatprep.subr.bf16.mxu0 0
    %1318 = vmatpush1.bf16.msra.mxu0 0
    %1319 = vmatprep.subr.bf16.mxu0 0
    %1320 = vmatpush1.bf16.msra.mxu0 0
    %1321 = vmatprep.subr.bf16.mxu0 0
    %1322 = vmatpush1.bf16.msra.mxu0 0
    %1323 = vmatprep.subr.bf16.mxu0 0
    %1324 = vmatpush1.bf16.msra.mxu0 0
    %1325 = vmatprep.subr.bf16.mxu0 0
    %1326 = vmatpush1.bf16.msra.mxu0 0
    %1327 = vmatprep.subr.bf16.mxu0 0
    %1328 = vmatpush1.bf16.msra.mxu0 0
    %1329 = vmatprep.subr.bf16.mxu0 0
    %1330 = vmatpush1.bf16.msra.mxu0 %v1313
    %1331 = vmatprep.subr.bf16.mxu0 0
    %1332 = vmatpush2.bf16.msra.mxu0 0
    %1333 = vmatprep.subr.bf16.mxu0 0
    %1334 = vmatpush2.bf16.msra.mxu0 0
    %1335 = vmatprep.subr.bf16.mxu0 0
    %1336 = vmatpush2.bf16.msra.mxu0 0
    %1337 = vmatprep.subr.bf16.mxu0 0
    %1338 = vmatpush2.bf16.msra.mxu0 0
    %1339 = vmatprep.subr.bf16.mxu0 0
    %1340 = vmatpush2.bf16.msra.mxu0 0
    %1341 = vmatprep.subr.bf16.mxu0 0
    %1342 = vmatpush2.bf16.msra.mxu0 0
    %1343 = vmatprep.subr.bf16.mxu0 0
    %1344 = vmatpush2.bf16.msra.mxu0 0
    %1345 = vmatprep.subr.bf16.mxu0 0
    %1346 = vmatpush2.bf16.msra.mxu0 0
    %1347 = vmatprep.mubr.bf16.mxu0 0
    %1348 = vmatmul.mubr.bf16.gmra.mxu0 %v1307
    %v1349 = vpop.f32.mrf.mxu0
    %v1350 = vadd.f32 0.0, %v1349
    %v1351 = vpop.f32.mrf.mxu0
    %v1352 = vpop.f32.mrf.mxu0
    %v1353 = vadd.f32 0.0, %v1352
    %v1354 = vpop.f32.mrf.mxu0
    %1355 = vmatprep.mubr.bf16.mxu0 0
    %1356 = vmatmul.mubr.bf16.gmra.mxu0 %v1310
    %v1357 = vpop.f32.mrf.mxu0
    %v1358 = vadd.f32 0.0, %v1357
    %v1359 = vpop.f32.mrf.mxu0
    %v1360 = vpop.f32.mrf.mxu0
    %v1361 = vadd.f32 0.0, %v1360
    %v1362 = vpop.f32.mrf.mxu0
    %1363 = vdwg.mxu0
    %1365 = vset.pattern.permute.xlu0 0
    %1366 = vperm.xlu0 %1365, %v192
    %v1367 = vpop.permute.xlu0 %1366
    %1370 = vset.pattern.permute.xlu0 0
    %1371 = vperm.xlu0 %1370, %v193
    %v1372 = vpop.permute.xlu0 %1371
    %1375 = vset.pattern.permute.xlu0 0
    %1376 = vperm.xlu0 %1375, %v194
    %v1377 = vpop.permute.xlu0 %1376
    %1380 = vset.pattern.permute.xlu0 0
    %1381 = vperm.xlu0 %1380, %v195
    %v1382 = vpop.permute.xlu0 %1381
    %v1384 = vmul.f32 %v1350, %v1367
    %v1385 = vmul.f32 %v1353, %v1372
    %v1386 = vmul.f32 %v1358, %v1377
    %v1387 = vmul.f32 %v1361, %v1382
    %v1388 = vld [vmem:[%s10] sm:$0x1]
    %v1390 = vlaneseq
    %v1391 = vshrl.u32 %v1390, 7
    %v1392 = vsub.s32 0, %v1391
    %v1393 = vrot.slane %v1388, %v1392
    %v1395 = vadd.f32 %v1384, %v1393
    %v1396 = vadd.f32 %v1385, %v1393
    %v1397 = vadd.f32 %v1386, %v1393
    %v1398 = vadd.f32 %v1387, %v1393
    %vm1399 = vcmp.gt.f32.partialorder %v1395, 0.0
    %vm1400 = vcmp.gt.f32.partialorder %v1396, 0.0
    %vm1401 = vcmp.gt.f32.partialorder %v1397, 0.0
    %vm1402 = vcmp.gt.f32.partialorder %v1398, 0.0
    %v1403 = vmul.f32 %v1395, 0.2
    %v1404 = vmul.f32 %v1396, 0.2
    %v1405 = vmul.f32 %v1397, 0.2
    %v1406 = vmul.f32 %v1398, 0.2
    %v1407 = vsel %vm1399, %v1395, %v1403
    %v1408 = vsel %vm1400, %v1396, %v1404
    %v1409 = vsel %vm1401, %v1397, %v1405
    %v1410 = vsel %vm1402, %v1398, %v1406
    %1411 = vst.msk [vmem:[#allocation2] sm:$0xff] %vm42, %v1407
    %1412 = vst.msk [vmem:[#allocation2 + $0x8] sm:$0xff] %vm42, %v1408
    %1413 = vst.msk [vmem:[#allocation2 + $0x10] sm:$0xff] %vm42, %v1409
    %1414 = vst.msk [vmem:[#allocation2 + $0x18] sm:$0xff] %vm42, %v1410
    // Predicated region
    $region46: #{sthan_forward.1} parent=1 // pred_check
      _
    $region47: #{sthan_forward.1} parent=1 // pred_check_branch
      %1416 = sbr.rel (0) target = $region49
    $region48: #{sthan_forward.1} parent=1 // pred_region
      %s1418 = ssub.s32 512, 512
      %1419 = vsyncadd [#allocation3], %s1418
      %s1420 = sshll.u32 [#allocation2], 4
      %s1421 = int_to_ptr.vmem [resolvable:$true] %s1420
      %1426 = dma.vmem_to_hbm [thread:$0]  %s1421, 512, %s11, [#allocation3], 128, 128, 8
    $region49: #{sthan_forward.1} parent=1 // pred_fallthru
      _
    // Predicated region
    $region50: #{sthan_forward.1} parent=1 // pred_check
      _
    $region51: #{sthan_forward.1} parent=1 // pred_check_branch
      %1428 = sbr.rel (0) target = $region53
    $region52: #{sthan_forward.1} parent=1 // pred_region
      %1429 = dma.done [#allocation3], 512
    $region53: #{sthan_forward.1} parent=1 // pred_fallthru
      _
    %1430 = vsyncpa [#allocation3], 1

</llo_original>
